<compile_context>
chip_gen: v7x
topology: tpu7x:2x2x1
jax: 0.10.0
libtpu: 0.0.40
codegen_flags: <defaults>
</compile_context>

<pallas_src>
import functools

import jax
import jax.numpy as jnp
from jax.experimental import pallas as pl
from jax.experimental.pallas import tpu as pltpu

HIDDEN = 256
W4_PAD = 128    # lane-padded width of the fused final-layer weight (MXU N dim)
OUT_ROWS = 8    # sublane-padded number of output rows (>= number of critics)


def _round_up(x, m):
    return ((x + m - 1) // m) * m


def _num_tensorcores():
    """2 on v7x (dual TensorCore), else 1.  Best-effort, defaults to 1."""
    try:
        kind = jax.devices()[0].device_kind.lower()
        if "v7" in kind:
            return 2
    except Exception:  # pragma: no cover - defensive
        pass
    return 1


# ----------------------------------------------------------------------------
# Pallas kernel: one batch tile through N fused 4-layer MLP critics
# ----------------------------------------------------------------------------
def _make_soft_q_kernel(n_critics):
    def kernel(x_ref, a_ref, *refs):
        out_ref = refs[-1]       # (OUT_ROWS, tb) f32
        b4_ref = refs[-2]        # (1, W4_PAD) f32, critic c's bias at column c
        xb = x_ref[...].astype(jnp.bfloat16)
        ab = a_ref[...].astype(jnp.bfloat16)

        acc = None               # (tb, W4_PAD) f32, column c = critic c's q
        for c in range(n_critics):
            (w1x, w1a, b1, w2, b2, w3, b3, w4p) = refs[8 * c: 8 * c + 8]

            # No in-kernel concat: x @ w1_obs + a @ w1_act == cat([x,a]) @ w1.
            h = (jnp.dot(xb, w1x[...], preferred_element_type=jnp.float32)
                 + jnp.dot(ab, w1a[...], preferred_element_type=jnp.float32)
                 + b1[...])
            h = jnp.maximum(h, 0.0)

            h = jnp.dot(h.astype(jnp.bfloat16), w2[...],
                        preferred_element_type=jnp.float32) + b2[...]
            h = jnp.maximum(h, 0.0)

            h = jnp.dot(h.astype(jnp.bfloat16), w3[...],
                        preferred_element_type=jnp.float32) + b3[...]
            h = jnp.maximum(h, 0.0)

            # Final layer: w4 of critic c lives in column c of the padded
            # (256, 128) weight, so all critics accumulate into one f32 tile.
            # TODO(synk): on v6e this N=128 matmul could be replaced by a VPU
            # multiply + cross-lane reduce to skip the padded weight entirely.
            q_c = jnp.dot(h.astype(jnp.bfloat16), w4p[...],
                          preferred_element_type=jnp.float32)
            acc = q_c if acc is None else acc + q_c

        qpad = acc + b4_ref[...]                 # (tb, W4_PAD); cols >= n are 0
        qT = jnp.transpose(qpad)                 # (W4_PAD, tb) via XLU (free vs MXU)
        out_ref[...] = qT[:OUT_ROWS, :]          # lane-dense (8, tb) unmasked store

    return kernel


# ----------------------------------------------------------------------------
# One-time parameter transform: torch-layout f32 -> kernel layout
# ----------------------------------------------------------------------------
def prepare_params(critic_params, obs_dim):
    """critic_params: list of per-critic tuples (w1,b1,w2,b2,w3,b3,w4,b4),
    torch layout (w1: (obs_dim+act_dim, 256), w4: (256, 1), biases (1, H))."""
    n = len(critic_params)
    assert 1 <= n <= OUT_ROWS
    flat = []
    b4row = jnp.zeros((1, W4_PAD), jnp.float32)
    for c, (w1, b1, w2, b2, w3, b3, w4, b4) in enumerate(critic_params):
        w1x = w1[:obs_dim].astype(jnp.bfloat16)           # (obs_dim, 256)
        w1a = w1[obs_dim:].astype(jnp.bfloat16)           # (act_dim, 256)
        w4p = jnp.zeros((HIDDEN, W4_PAD), jnp.bfloat16).at[:, c:c + 1].set(
            w4.astype(jnp.bfloat16))                      # real column = c
        flat += [w1x, w1a, b1.reshape(1, HIDDEN).astype(jnp.float32),
                 w2.astype(jnp.bfloat16), b2.reshape(1, HIDDEN).astype(jnp.float32),
                 w3.astype(jnp.bfloat16), b3.reshape(1, HIDDEN).astype(jnp.float32),
                 w4p]
        b4row = b4row.at[0, c].set(b4.reshape(()))
    return tuple(flat) + (b4row,)


# ----------------------------------------------------------------------------
# Wrapper: tiled pallas_call over the batch
# ----------------------------------------------------------------------------
@functools.partial(jax.jit, static_argnames=("block_b",))
def soft_q_forward_multi(x, a, kparams, block_b=2048):
    """x: (B, obs_dim) f32, a: (B, act_dim) f32 -> tuple of n_critics (B,1) f32."""
    kparams = tuple(kparams)
    n_critics = (len(kparams) - 1) // 8
    B, obs_dim = x.shape
    act_dim = a.shape[1]
    H = HIDDEN

    # --- batch tile: multiple of 128, as large as possible; grid >= 2 only on
    # dual-TC chips so the "parallel" axis actually shards across cores.
    block_b = max(128, _round_up(int(block_b), 128))
    bp0 = _round_up(B, 128)
    n_tc = _num_tensorcores()
    if n_tc > 1 and bp0 >= 2 * 128:
        tb_target = _round_up(-(-bp0 // n_tc), 128)
    else:
        tb_target = bp0
    tb = min(block_b, tb_target)
    Bp = _round_up(B, tb)
    if Bp != B:
        x = jnp.pad(x, ((0, Bp - B), (0, 0)))
        a = jnp.pad(a, ((0, Bp - B), (0, 0)))
    grid = (Bp // tb,)

    # --- cost estimate (advisory)
    flops = 2 * Bp * n_critics * ((obs_dim + act_dim) * H + 2 * H * H + H * W4_PAD)
    weight_bytes = sum(int(w.size) * w.dtype.itemsize for w in kparams)
    bytes_accessed = (int(x.size) * 4 + int(a.size) * 4
                      + weight_bytes + OUT_ROWS * Bp * 4)
    cost = pl.CostEstimate(flops=flops, transcendentals=0,
                           bytes_accessed=bytes_accessed)

    # --- specs: activations tiled over batch, weights resident (constant
    # index_map -> not re-DMA'd across grid steps), output lane-dense (8, tb).
    weight_specs = []
    for _ in range(n_critics):
        weight_specs += [
            pl.BlockSpec((obs_dim, H), lambda i: (0, 0)),     # w1_obs
            pl.BlockSpec((act_dim, H), lambda i: (0, 0)),     # w1_act
            pl.BlockSpec((1, H), lambda i: (0, 0)),           # b1
            pl.BlockSpec((H, H), lambda i: (0, 0)),           # w2
            pl.BlockSpec((1, H), lambda i: (0, 0)),           # b2
            pl.BlockSpec((H, H), lambda i: (0, 0)),           # w3
            pl.BlockSpec((1, H), lambda i: (0, 0)),           # b3
            pl.BlockSpec((H, W4_PAD), lambda i: (0, 0)),      # w4 (padded, col c)
        ]
    weight_specs.append(pl.BlockSpec((1, W4_PAD), lambda i: (0, 0)))  # fused b4 row

    vmem_limit = 64 * 1024 * 1024 if tb >= 1024 else None

    out = pl.pallas_call(
        _make_soft_q_kernel(n_critics),
        out_shape=jax.ShapeDtypeStruct((OUT_ROWS, Bp), jnp.float32),
        grid_spec=pltpu.PrefetchScalarGridSpec(
            num_scalar_prefetch=0,
            grid=grid,
            in_specs=[
                pl.BlockSpec((tb, obs_dim), lambda i: (i, 0)),   # x tile
                pl.BlockSpec((tb, act_dim), lambda i: (i, 0)),   # a tile
            ] + weight_specs,
            out_specs=pl.BlockSpec((OUT_ROWS, tb), lambda i: (0, i)),
        ),
        compiler_params=pltpu.CompilerParams(
            dimension_semantics=("parallel",),
            vmem_limit_bytes=vmem_limit),
        cost_estimate=cost,
    )(x, a, *kparams)

    # Row c = critic c; columns past B are padded-batch garbage -> slice them off.
    return tuple(out[c, :B].reshape(B, 1) for c in range(n_critics))


def soft_q_forward(x, a, kparams, block_b=2048):
    """Single SoftQNetwork forward (matches the torch module): (B,1)."""
    (q,) = soft_q_forward_multi(x, a, kparams, block_b=block_b)
    return q


# ----------------------------------------------------------------------------
# Deterministic parameter init (mimics the torch module's layer_init)
# ----------------------------------------------------------------------------
def orthogonal(key, shape, gain):
    rows, cols = shape
    n = max(rows, cols)
    m = jax.random.normal(key, (n, n), dtype=jnp.float32)
    q, r = jnp.linalg.qr(m)
    q = q * jnp.sign(jnp.diag(r))
    return gain * q[:rows, :cols]


def init_params(key, obs_dim, act_dim, hidden=HIDDEN):
    d_in = obs_dim + act_dim
    ks = jax.random.split(key, 4)
    w1 = orthogonal(ks[0], (d_in, hidden), gain=jnp.sqrt(2.0))
    w2 = orthogonal(ks[1], (hidden, hidden), gain=jnp.sqrt(2.0))
    w3 = orthogonal(ks[2], (hidden, hidden), gain=jnp.sqrt(2.0))
    w4 = orthogonal(ks[3], (hidden, 1), gain=0.01)
    b1 = jnp.zeros((1, hidden), jnp.float32)
    b2 = jnp.zeros((1, hidden), jnp.float32)
    b3 = jnp.zeros((1, hidden), jnp.float32)
    b4 = jnp.zeros((1, 1), jnp.float32)
    return (w1, b1, w2, b2, w3, b3, w4, b4)


# ----------------------------------------------------------------------------
# Pure-JAX references
# ----------------------------------------------------------------------------
def soft_q_ref_f32(x, a, params):
    (w1, b1, w2, b2, w3, b3, w4, b4) = params
    h = jnp.concatenate([x, a], axis=1)
    h = jnp.maximum(h @ w1 + b1, 0.0)
    h = jnp.maximum(h @ w2 + b2, 0.0)
    h = jnp.maximum(h @ w3 + b3, 0.0)
    return h @ w4 + b4


def soft_q_ref_mixed(x, a, params, obs_dim):
    """Mimics the kernel's bf16-operand / f32-accumulate math."""
    (w1, b1, w2, b2, w3, b3, w4, b4) = params
    xb = x.astype(jnp.bfloat16)
    ab = a.astype(jnp.bfloat16)
    w1x = w1[:obs_dim].astype(jnp.bfloat16)
    w1a = w1[obs_dim:].astype(jnp.bfloat16)
    h = (jnp.dot(xb, w1x, preferred_element_type=jnp.float32)
         + jnp.dot(ab, w1a, preferred_element_type=jnp.float32) + b1)
    h = jnp.maximum(h, 0.0)
    h = jnp.dot(h.astype(jnp.bfloat16), w2.astype(jnp.bfloat16),
                preferred_element_type=jnp.float32) + b2
    h = jnp.maximum(h, 0.0)
    h = jnp.dot(h.astype(jnp.bfloat16), w3.astype(jnp.bfloat16),
                preferred_element_type=jnp.float32) + b3
    h = jnp.maximum(h, 0.0)
    return jnp.dot(h.astype(jnp.bfloat16), w4.astype(jnp.bfloat16),
                   preferred_element_type=jnp.float32) + b4


if __name__ == "__main__":
    # Small synthetic env dims: obs_dim=24, act_dim=8 -> concat dim 32.
    B, OBS, ACT = 8, 24, 8

    key = jax.random.PRNGKey(0)
    k_x, k_a, k_p1, k_p2 = jax.random.split(key, 4)
    x = jax.random.normal(k_x, (B, OBS), dtype=jnp.float32)
    a = jax.random.normal(k_a, (B, ACT), dtype=jnp.float32)
    p1 = init_params(k_p1, OBS, ACT)
    p2 = init_params(k_p2, OBS, ACT)

    # --- single critic (matches the torch module spec), grid = 1 ---
    kp1 = prepare_params([p1], OBS)
    q = jax.block_until_ready(soft_q_forward(x, a, kp1))
    assert q.shape == (B, 1)
    assert jnp.allclose(q, soft_q_ref_mixed(x, a, p1, OBS), atol=5e-3, rtol=5e-3), \
        "mismatch vs bf16 ref"
    assert jnp.allclose(q, soft_q_ref_f32(x, a, p1), atol=3e-2, rtol=3e-2), \
        "mismatch vs f32 ref"

    # --- fused twin critics (SAC qf1 + qf2 in one pallas_call) ---
    kp_pair = prepare_params([p1, p2], OBS)
    q1, q2 = soft_q_forward_multi(x, a, kp_pair)
    jax.block_until_ready((q1, q2))
    assert jnp.allclose(q1, soft_q_ref_mixed(x, a, p1, OBS), atol=5e-3, rtol=5e-3)
    assert jnp.allclose(q2, soft_q_ref_mixed(x, a, p2, OBS), atol=5e-3, rtol=5e-3)

    # --- larger batch exercising padding + a multi-step grid with resident
    #     weights (block_b clamp keeps the tile a multiple of 128) ---
    B2 = 300
    x2 = jax.random.normal(jax.random.PRNGKey(1), (B2, OBS), dtype=jnp.float32)
    a2 = jax.random.normal(jax.random.PRNGKey(2), (B2, ACT), dtype=jnp.float32)
    q1b, q2b = soft_q_forward_multi(x2, a2, kp_pair, block_b=200)  # clamped -> 256
    jax.block_until_ready((q1b, q2b))
    assert q1b.shape == (B2, 1) and q2b.shape == (B2, 1)
    assert jnp.allclose(q1b, soft_q_ref_mixed(x2, a2, p1, OBS), atol=5e-3, rtol=5e-3)
    assert jnp.allclose(q2b, soft_q_ref_mixed(x2, a2, p2, OBS), atol=5e-3, rtol=5e-3)

    print("KERNEL_OK")
</pallas_src>

<mosaic_0001>
module attributes {stable_mosaic.version = 11 : i64} {
  func.func @kernel(%arg0: i32, %arg1: memref<128x24xf32, #tpu.memory_space<vmem>>, %arg2: memref<128x8xf32, #tpu.memory_space<vmem>>, %arg3: memref<24x256xbf16, #tpu.memory_space<vmem>>, %arg4: memref<8x256xbf16, #tpu.memory_space<vmem>>, %arg5: memref<1x256xf32, #tpu.memory_space<vmem>>, %arg6: memref<256x256xbf16, #tpu.memory_space<vmem>>, %arg7: memref<1x256xf32, #tpu.memory_space<vmem>>, %arg8: memref<256x256xbf16, #tpu.memory_space<vmem>>, %arg9: memref<1x256xf32, #tpu.memory_space<vmem>>, %arg10: memref<256x128xbf16, #tpu.memory_space<vmem>>, %arg11: memref<1x128xf32, #tpu.memory_space<vmem>>, %arg12: memref<8x128xf32, #tpu.memory_space<vmem>>) attributes {dimension_semantics = [#tpu.dimension_semantics<parallel>], iteration_bounds = array<i64: 1>, scalar_prefetch = 0 : i64, scratch_operands = 0 : i64, tpu.core_type = #tpu.core_type<tc>, window_params = [{transform_indices = @transform_0, window_bounds = array<i64: 128, 24>}, {transform_indices = @transform_1, window_bounds = array<i64: 128, 8>}, {pipeline_mode = #tpu.pipeline_mode<synchronous>, transform_indices = @transform_2, window_bounds = array<i64: 24, 256>}, {pipeline_mode = #tpu.pipeline_mode<synchronous>, transform_indices = @transform_3, window_bounds = array<i64: 8, 256>}, {pipeline_mode = #tpu.pipeline_mode<synchronous>, transform_indices = @transform_4, window_bounds = array<i64: 1, 256>}, {pipeline_mode = #tpu.pipeline_mode<synchronous>, transform_indices = @transform_5, window_bounds = array<i64: 256, 256>}, {pipeline_mode = #tpu.pipeline_mode<synchronous>, transform_indices = @transform_6, window_bounds = array<i64: 1, 256>}, {pipeline_mode = #tpu.pipeline_mode<synchronous>, transform_indices = @transform_7, window_bounds = array<i64: 256, 256>}, {pipeline_mode = #tpu.pipeline_mode<synchronous>, transform_indices = @transform_8, window_bounds = array<i64: 1, 256>}, {pipeline_mode = #tpu.pipeline_mode<synchronous>, transform_indices = @transform_9, window_bounds = array<i64: 256, 128>}, {pipeline_mode = #tpu.pipeline_mode<synchronous>, transform_indices = @transform_10, window_bounds = array<i64: 1, 128>}, {transform_indices = @transform_11, window_bounds = array<i64: 8, 128>}]} {
    %c0 = arith.constant 0 : index
    %c0_0 = arith.constant 0 : index
    %0 = vector.load %arg1[%c0, %c0_0] : memref<128x24xf32, #tpu.memory_space<vmem>>, vector<128x24xf32>
    %1 = arith.truncf %0 : vector<128x24xf32> to vector<128x24xbf16>
    %c0_1 = arith.constant 0 : index
    %c0_2 = arith.constant 0 : index
    %2 = vector.load %arg2[%c0_1, %c0_2] : memref<128x8xf32, #tpu.memory_space<vmem>>, vector<128x8xf32>
    %3 = arith.truncf %2 : vector<128x8xf32> to vector<128x8xbf16>
    %c0_3 = arith.constant 0 : index
    %c0_4 = arith.constant 0 : index
    %4 = vector.load %arg3[%c0_3, %c0_4] : memref<24x256xbf16, #tpu.memory_space<vmem>>, vector<24x256xbf16>
    %cst = arith.constant dense<0.000000e+00> : vector<128x256xf32>
    %5 = tpu.matmul %1, %4, %cst {dimension_numbers = #tpu.dot_dimension_numbers<[1], [0], [0], [1], [0, 0, 1, 1], [], []>} : vector<128x24xbf16>, vector<24x256xbf16>, vector<128x256xf32> -> vector<128x256xf32>
    %c0_5 = arith.constant 0 : index
    %c0_6 = arith.constant 0 : index
    %6 = vector.load %arg4[%c0_5, %c0_6] : memref<8x256xbf16, #tpu.memory_space<vmem>>, vector<8x256xbf16>
    %cst_7 = arith.constant dense<0.000000e+00> : vector<128x256xf32>
    %7 = tpu.matmul %3, %6, %cst_7 {dimension_numbers = #tpu.dot_dimension_numbers<[1], [0], [0], [1], [0, 0, 1, 1], [], []>} : vector<128x8xbf16>, vector<8x256xbf16>, vector<128x256xf32> -> vector<128x256xf32>
    %8 = arith.addf %5, %7 : vector<128x256xf32>
    %c0_8 = arith.constant 0 : index
    %c0_9 = arith.constant 0 : index
    %9 = vector.load %arg5[%c0_8, %c0_9] : memref<1x256xf32, #tpu.memory_space<vmem>>, vector<1x256xf32>
    %10 = vector.broadcast %9 : vector<1x256xf32> to vector<128x256xf32>
    %11 = arith.addf %8, %10 : vector<128x256xf32>
    %cst_10 = arith.constant 0.000000e+00 : f32
    %12 = vector.broadcast %cst_10 : f32 to vector<128x256xf32>
    %13 = arith.maximumf %11, %12 : vector<128x256xf32>
    %14 = arith.truncf %13 : vector<128x256xf32> to vector<128x256xbf16>
    %c0_11 = arith.constant 0 : index
    %c0_12 = arith.constant 0 : index
    %15 = vector.load %arg6[%c0_11, %c0_12] : memref<256x256xbf16, #tpu.memory_space<vmem>>, vector<256x256xbf16>
    %cst_13 = arith.constant dense<0.000000e+00> : vector<128x256xf32>
    %16 = tpu.matmul %14, %15, %cst_13 {dimension_numbers = #tpu.dot_dimension_numbers<[1], [0], [0], [1], [0, 0, 1, 1], [], []>} : vector<128x256xbf16>, vector<256x256xbf16>, vector<128x256xf32> -> vector<128x256xf32>
    %c0_14 = arith.constant 0 : index
    %c0_15 = arith.constant 0 : index
    %17 = vector.load %arg7[%c0_14, %c0_15] : memref<1x256xf32, #tpu.memory_space<vmem>>, vector<1x256xf32>
    %18 = vector.broadcast %17 : vector<1x256xf32> to vector<128x256xf32>
    %19 = arith.addf %16, %18 : vector<128x256xf32>
    %cst_16 = arith.constant 0.000000e+00 : f32
    %20 = vector.broadcast %cst_16 : f32 to vector<128x256xf32>
    %21 = arith.maximumf %19, %20 : vector<128x256xf32>
    %22 = arith.truncf %21 : vector<128x256xf32> to vector<128x256xbf16>
    %c0_17 = arith.constant 0 : index
    %c0_18 = arith.constant 0 : index
    %23 = vector.load %arg8[%c0_17, %c0_18] : memref<256x256xbf16, #tpu.memory_space<vmem>>, vector<256x256xbf16>
    %cst_19 = arith.constant dense<0.000000e+00> : vector<128x256xf32>
    %24 = tpu.matmul %22, %23, %cst_19 {dimension_numbers = #tpu.dot_dimension_numbers<[1], [0], [0], [1], [0, 0, 1, 1], [], []>} : vector<128x256xbf16>, vector<256x256xbf16>, vector<128x256xf32> -> vector<128x256xf32>
    %c0_20 = arith.constant 0 : index
    %c0_21 = arith.constant 0 : index
    %25 = vector.load %arg9[%c0_20, %c0_21] : memref<1x256xf32, #tpu.memory_space<vmem>>, vector<1x256xf32>
    %26 = vector.broadcast %25 : vector<1x256xf32> to vector<128x256xf32>
    %27 = arith.addf %24, %26 : vector<128x256xf32>
    %cst_22 = arith.constant 0.000000e+00 : f32
    %28 = vector.broadcast %cst_22 : f32 to vector<128x256xf32>
    %29 = arith.maximumf %27, %28 : vector<128x256xf32>
    %30 = arith.truncf %29 : vector<128x256xf32> to vector<128x256xbf16>
    %c0_23 = arith.constant 0 : index
    %c0_24 = arith.constant 0 : index
    %31 = vector.load %arg10[%c0_23, %c0_24] : memref<256x128xbf16, #tpu.memory_space<vmem>>, vector<256x128xbf16>
    %cst_25 = arith.constant dense<0.000000e+00> : vector<128x128xf32>
    %32 = tpu.matmul %30, %31, %cst_25 {dimension_numbers = #tpu.dot_dimension_numbers<[1], [0], [0], [1], [0, 0, 1, 1], [], []>} : vector<128x256xbf16>, vector<256x128xbf16>, vector<128x128xf32> -> vector<128x128xf32>
    %c0_26 = arith.constant 0 : index
    %c0_27 = arith.constant 0 : index
    %33 = vector.load %arg11[%c0_26, %c0_27] : memref<1x128xf32, #tpu.memory_space<vmem>>, vector<1x128xf32>
    %34 = vector.broadcast %33 : vector<1x128xf32> to vector<128x128xf32>
    %35 = arith.addf %32, %34 : vector<128x128xf32>
    %36 = tpu.transpose %35, [1, 0] : vector<128x128xf32> -> vector<128x128xf32>
    %37 = vector.extract_strided_slice %36 {offsets = [0, 0], sizes = [8, 128], strides = [1, 1]} : vector<128x128xf32> to vector<8x128xf32>
    %c0_28 = arith.constant 0 : index
    %c0_29 = arith.constant 0 : index
    %38 = vector.load %arg12[%c0_28, %c0_29] : memref<8x128xf32, #tpu.memory_space<vmem>>, vector<8x128xf32>
    tpu.vector_store %arg12[%c0_28, %c0_29], %37 {strides = array<i32>} : memref<8x128xf32, #tpu.memory_space<vmem>>, vector<8x128xf32>,
    return
  }
  func.func @transform_0(%arg0: i32) -> (i32, i32) {
    %c0_i32 = arith.constant 0 : i32
    %c0_i32_0 = arith.constant 0 : i32
    return %arg0, %c0_i32 : i32, i32
  }
  func.func @transform_1(%arg0: i32) -> (i32, i32) {
    %c0_i32 = arith.constant 0 : i32
    %c0_i32_0 = arith.constant 0 : i32
    return %arg0, %c0_i32 : i32, i32
  }
  func.func @transform_2(%arg0: i32) -> (i32, i32) {
    %c0_i32 = arith.constant 0 : i32
    %c0_i32_0 = arith.constant 0 : i32
    %c0_i32_1 = arith.constant 0 : i32
    return %c0_i32, %c0_i32_0 : i32, i32
  }
  func.func @transform_3(%arg0: i32) -> (i32, i32) {
    %c0_i32 = arith.constant 0 : i32
    %c0_i32_0 = arith.constant 0 : i32
    %c0_i32_1 = arith.constant 0 : i32
    return %c0_i32, %c0_i32_0 : i32, i32
  }
  func.func @transform_4(%arg0: i32) -> (i32, i32) {
    %c0_i32 = arith.constant 0 : i32
    %c0_i32_0 = arith.constant 0 : i32
    %c0_i32_1 = arith.constant 0 : i32
    return %c0_i32, %c0_i32_0 : i32, i32
  }
  func.func @transform_5(%arg0: i32) -> (i32, i32) {
    %c0_i32 = arith.constant 0 : i32
    %c0_i32_0 = arith.constant 0 : i32
    %c0_i32_1 = arith.constant 0 : i32
    return %c0_i32, %c0_i32_0 : i32, i32
  }
  func.func @transform_6(%arg0: i32) -> (i32, i32) {
    %c0_i32 = arith.constant 0 : i32
    %c0_i32_0 = arith.constant 0 : i32
    %c0_i32_1 = arith.constant 0 : i32
    return %c0_i32, %c0_i32_0 : i32, i32
  }
  func.func @transform_7(%arg0: i32) -> (i32, i32) {
    %c0_i32 = arith.constant 0 : i32
    %c0_i32_0 = arith.constant 0 : i32
    %c0_i32_1 = arith.constant 0 : i32
    return %c0_i32, %c0_i32_0 : i32, i32
  }
  func.func @transform_8(%arg0: i32) -> (i32, i32) {
    %c0_i32 = arith.constant 0 : i32
    %c0_i32_0 = arith.constant 0 : i32
    %c0_i32_1 = arith.constant 0 : i32
    return %c0_i32, %c0_i32_0 : i32, i32
  }
  func.func @transform_9(%arg0: i32) -> (i32, i32) {
    %c0_i32 = arith.constant 0 : i32
    %c0_i32_0 = arith.constant 0 : i32
    %c0_i32_1 = arith.constant 0 : i32
    return %c0_i32, %c0_i32_0 : i32, i32
  }
  func.func @transform_10(%arg0: i32) -> (i32, i32) {
    %c0_i32 = arith.constant 0 : i32
    %c0_i32_0 = arith.constant 0 : i32
    %c0_i32_1 = arith.constant 0 : i32
    return %c0_i32, %c0_i32_0 : i32, i32
  }
  func.func @transform_11(%arg0: i32) -> (i32, i32) {
    %c0_i32 = arith.constant 0 : i32
    %c0_i32_0 = arith.constant 0 : i32
    return %c0_i32, %arg0 : i32, i32
  }
}

</mosaic_0001>

<llo_original>
// kernel: soft_q_forward_multi.1
$region0: #{soft_q_forward_multi.1}
  #allocation0 [shape = 'u32[]', space=smem, size = 0x4, offset = 0x4, fixed_abs, tag = 'smem constant byte address 0x4 - core index']
  #allocation1 [shape = 'u32[144,128]{1,0:T(1,128)}', space=vmem, size = 0x12000, scoped, tag = 'internal scratch']
  %s0 = inlined_call_operand.vmem [shape: f32[128,24], index: 0, kind: input, shape index: {}]
  %s1 = inlined_call_operand.vmem [shape: f32[128,8], index: 1, kind: input, shape index: {}]
  %s2 = inlined_call_operand.vmem [shape: bf16[24,256], index: 2, kind: input, shape index: {}]
  %s3 = inlined_call_operand.vmem [shape: bf16[8,256], index: 3, kind: input, shape index: {}]
  %s4 = inlined_call_operand.vmem [shape: f32[1,256], index: 4, kind: input, shape index: {}]
  %s5 = inlined_call_operand.vmem [shape: bf16[256,256], index: 5, kind: input, shape index: {}]
  %s6 = inlined_call_operand.vmem [shape: f32[1,256], index: 6, kind: input, shape index: {}]
  %s7 = inlined_call_operand.hbm [shape: bf16[256,256], index: 7, kind: input, shape index: {}]
  %s8 = inlined_call_operand.vmem [shape: f32[1,256], index: 8, kind: input, shape index: {}]
  %s9 = inlined_call_operand.hbm [shape: bf16[256,128], index: 9, kind: input, shape index: {}]
  %s10 = inlined_call_operand.vmem [shape: f32[1,128], index: 10, kind: input, shape index: {}]
  %s11 = inlined_call_operand.vmem [shape: f32[8,128], index: 11, kind: output, shape index: {}]
  %s12 = sld [smem:[#allocation0]]
  $region62: #{soft_q_forward_multi.1} parent=0
    _
  %s14 = ssub.s32 1, %s12
  %s15 = scalar_select 0, %s14, %s12
  $region1: #{soft_q_forward_multi.1} parent=0
    #allocation2 [shape = 'u8[131072]{0}', space=vmem, size = 0x20000, scoped, tag = 'input window, operand 7, single buffered']
    #allocation3 [shape = 's32[1]{0}', space=sflag, size = 0x4, scoped, tag = 'scoped memory for soft_q_forward_multi.1']
    #allocation4 [shape = 'u8[65536]{0}', space=vmem, size = 0x10000, scoped, tag = 'input window, operand 9, single buffered']
    #allocation5 [shape = 's32[1]{0}', space=sflag, size = 0x4, scoped, tag = 'scoped memory for soft_q_forward_multi.1']
    %16 = vsyncpa [#allocation3], 0
    %17 = vsyncpa [#allocation5], 0
    // Predicated region
    $region2: #{soft_q_forward_multi.1} parent=1 // pred_check
      _
    $region3: #{soft_q_forward_multi.1} parent=1 // pred_check_branch
      %19 = sbr.rel (0) target = $region5
    $region4: #{soft_q_forward_multi.1} parent=1 // pred_region
      _
    $region5: #{soft_q_forward_multi.1} parent=1 // pred_fallthru
      _
    // Predicated region
    $region6: #{soft_q_forward_multi.1} parent=1 // pred_check
      _
    $region7: #{soft_q_forward_multi.1} parent=1 // pred_check_branch
      %21 = sbr.rel (0) target = $region9
    $region8: #{soft_q_forward_multi.1} parent=1 // pred_region
      _
    $region9: #{soft_q_forward_multi.1} parent=1 // pred_fallthru
      _
    // Predicated region
    $region10: #{soft_q_forward_multi.1} parent=1 // pred_check
      _
    $region11: #{soft_q_forward_multi.1} parent=1 // pred_check_branch
      %23 = sbr.rel (0) target = $region13
    $region12: #{soft_q_forward_multi.1} parent=1 // pred_region
      _
    $region13: #{soft_q_forward_multi.1} parent=1 // pred_fallthru
      _
    // Predicated region
    $region14: #{soft_q_forward_multi.1} parent=1 // pred_check
      _
    $region15: #{soft_q_forward_multi.1} parent=1 // pred_check_branch
      %25 = sbr.rel (0) target = $region17
    $region16: #{soft_q_forward_multi.1} parent=1 // pred_region
      _
    $region17: #{soft_q_forward_multi.1} parent=1 // pred_fallthru
      _
    // Predicated region
    $region18: #{soft_q_forward_multi.1} parent=1 // pred_check
      _
    $region19: #{soft_q_forward_multi.1} parent=1 // pred_check_branch
      %27 = sbr.rel (0) target = $region21
    $region20: #{soft_q_forward_multi.1} parent=1 // pred_region
      _
    $region21: #{soft_q_forward_multi.1} parent=1 // pred_fallthru
      _
    // Predicated region
    $region22: #{soft_q_forward_multi.1} parent=1 // pred_check
      _
    $region23: #{soft_q_forward_multi.1} parent=1 // pred_check_branch
      %29 = sbr.rel (0) target = $region25
    $region24: #{soft_q_forward_multi.1} parent=1 // pred_region
      _
    $region25: #{soft_q_forward_multi.1} parent=1 // pred_fallthru
      _
    // Predicated region
    $region26: #{soft_q_forward_multi.1} parent=1 // pred_check
      _
    $region27: #{soft_q_forward_multi.1} parent=1 // pred_check_branch
      %31 = sbr.rel (0) target = $region29
    $region28: #{soft_q_forward_multi.1} parent=1 // pred_region
      _
    $region29: #{soft_q_forward_multi.1} parent=1 // pred_fallthru
      _
    // Predicated region
    $region30: #{soft_q_forward_multi.1} parent=1 // pred_check
      _
    $region31: #{soft_q_forward_multi.1} parent=1 // pred_check_branch
      %33 = sbr.rel (0) target = $region33
    $region32: #{soft_q_forward_multi.1} parent=1 // pred_region
      %s35 = ssub.s32 4096, 4096
      %36 = vsyncadd [#allocation3], %s35
      %s37 = sshll.u32 [#allocation2], 4
      %s38 = int_to_ptr.vmem [resolvable:$true] %s37
      %43 = dma.hbm_to_vmem [thread:$0]  %s7, 4096, %s38, [#allocation3], 128, 128, 8
    $region33: #{soft_q_forward_multi.1} parent=1 // pred_fallthru
      _
    // Predicated region
    $region34: #{soft_q_forward_multi.1} parent=1 // pred_check
      _
    $region35: #{soft_q_forward_multi.1} parent=1 // pred_check_branch
      %45 = sbr.rel (0) target = $region37
    $region36: #{soft_q_forward_multi.1} parent=1 // pred_region
      _
    $region37: #{soft_q_forward_multi.1} parent=1 // pred_fallthru
      _
    // Predicated region
    $region38: #{soft_q_forward_multi.1} parent=1 // pred_check
      _
    $region39: #{soft_q_forward_multi.1} parent=1 // pred_check_branch
      %47 = sbr.rel (0) target = $region41
    $region40: #{soft_q_forward_multi.1} parent=1 // pred_region
      %s49 = ssub.s32 2048, 2048
      %50 = vsyncadd [#allocation5], %s49
      %s51 = sshll.u32 [#allocation4], 4
      %s52 = int_to_ptr.vmem [resolvable:$true] %s51
      %57 = dma.hbm_to_vmem [thread:$0]  %s9, 2048, %s52, [#allocation5], 64, 64, 4
    $region41: #{soft_q_forward_multi.1} parent=1 // pred_fallthru
      _
    // Predicated region
    $region42: #{soft_q_forward_multi.1} parent=1 // pred_check
      _
    $region43: #{soft_q_forward_multi.1} parent=1 // pred_check_branch
      %59 = sbr.rel (0) target = $region45
    $region44: #{soft_q_forward_multi.1} parent=1 // pred_region
      _
    $region45: #{soft_q_forward_multi.1} parent=1 // pred_fallthru
      _
    // Predicated region
    $region46: #{soft_q_forward_multi.1} parent=1 // pred_check
      _
    $region47: #{soft_q_forward_multi.1} parent=1 // pred_check_branch
      %61 = sbr.rel (0) target = $region49
    $region48: #{soft_q_forward_multi.1} parent=1 // pred_region
      %62 = dma.done [#allocation3], 4096
    $region49: #{soft_q_forward_multi.1} parent=1 // pred_fallthru
      _
    // Predicated region
    $region50: #{soft_q_forward_multi.1} parent=1 // pred_check
      _
    $region51: #{soft_q_forward_multi.1} parent=1 // pred_check_branch
      %64 = sbr.rel (0) target = $region53
    $region52: #{soft_q_forward_multi.1} parent=1 // pred_region
      %65 = dma.done [#allocation5], 2048
    $region53: #{soft_q_forward_multi.1} parent=1 // pred_fallthru
      _
    %v67 = vld [vmem:[%s0] sm:$0xff]
    %v68 = vld [vmem:[%s0 + $0x8] sm:$0xff]
    %v69 = vld [vmem:[%s0 + $0x10] sm:$0xff]
    %v70 = vld [vmem:[%s0 + $0x18] sm:$0xff]
    %v71 = vld [vmem:[%s0 + $0x20] sm:$0xff]
    %v72 = vld [vmem:[%s0 + $0x28] sm:$0xff]
    %v73 = vld [vmem:[%s0 + $0x30] sm:$0xff]
    %v74 = vld [vmem:[%s0 + $0x38] sm:$0xff]
    %v75 = vld [vmem:[%s0 + $0x40] sm:$0xff]
    %v76 = vld [vmem:[%s0 + $0x48] sm:$0xff]
    %v77 = vld [vmem:[%s0 + $0x50] sm:$0xff]
    %v78 = vld [vmem:[%s0 + $0x58] sm:$0xff]
    %v79 = vld [vmem:[%s0 + $0x60] sm:$0xff]
    %v80 = vld [vmem:[%s0 + $0x68] sm:$0xff]
    %v81 = vld [vmem:[%s0 + $0x70] sm:$0xff]
    %v82 = vld [vmem:[%s0 + $0x78] sm:$0xff]
    %v83 = vpack.c.bf16 %v68, %v67
    %v84 = vpack.c.bf16 %v70, %v69
    %v85 = vpack.c.bf16 %v72, %v71
    %v86 = vpack.c.bf16 %v74, %v73
    %v87 = vpack.c.bf16 %v76, %v75
    %v88 = vpack.c.bf16 %v78, %v77
    %v89 = vpack.c.bf16 %v80, %v79
    %v90 = vpack.c.bf16 %v82, %v81
    %v91 = vld [vmem:[%s1] sm:$0xff]
    %v92 = vld [vmem:[%s1 + $0x8] sm:$0xff]
    %v93 = vld [vmem:[%s1 + $0x10] sm:$0xff]
    %v94 = vld [vmem:[%s1 + $0x18] sm:$0xff]
    %v95 = vld [vmem:[%s1 + $0x20] sm:$0xff]
    %v96 = vld [vmem:[%s1 + $0x28] sm:$0xff]
    %v97 = vld [vmem:[%s1 + $0x30] sm:$0xff]
    %v98 = vld [vmem:[%s1 + $0x38] sm:$0xff]
    %v99 = vld [vmem:[%s1 + $0x40] sm:$0xff]
    %v100 = vld [vmem:[%s1 + $0x48] sm:$0xff]
    %v101 = vld [vmem:[%s1 + $0x50] sm:$0xff]
    %v102 = vld [vmem:[%s1 + $0x58] sm:$0xff]
    %v103 = vld [vmem:[%s1 + $0x60] sm:$0xff]
    %v104 = vld [vmem:[%s1 + $0x68] sm:$0xff]
    %v105 = vld [vmem:[%s1 + $0x70] sm:$0xff]
    %v106 = vld [vmem:[%s1 + $0x78] sm:$0xff]
    %v107 = vpack.c.bf16 %v92, %v91
    %v108 = vpack.c.bf16 %v94, %v93
    %v109 = vpack.c.bf16 %v96, %v95
    %v110 = vpack.c.bf16 %v98, %v97
    %v111 = vpack.c.bf16 %v100, %v99
    %v112 = vpack.c.bf16 %v102, %v101
    %v113 = vpack.c.bf16 %v104, %v103
    %v114 = vpack.c.bf16 %v106, %v105
    %v115 = vld [vmem:[%s2] sm:$0xff]
    %v116 = vld [vmem:[%s2 + $0x8] sm:$0xff]
    %v117 = vld [vmem:[%s2 + $0x10] sm:$0xff]
    %v118 = vld [vmem:[%s3] sm:$0xff]
    %v120 = vunpack.c.l.b16 %v118
    %v121 = vunpack.c.h.b16 %v118
    %v122 = vpack.c.b16 %v120, %v120
    %v123 = vpack.c.b16 %v121, %v121
    %vm124 = vcmask 64512
    %v126 = vsel %vm124, %v107, 0
    %v129 = vsel %vm124, %v108, 0
    %v132 = vsel %vm124, %v109, 0
    %v135 = vsel %vm124, %v110, 0
    %v138 = vsel %vm124, %v111, 0
    %v141 = vsel %vm124, %v112, 0
    %v144 = vsel %vm124, %v113, 0
    %v147 = vsel %vm124, %v114, 0
    %vm149 = vcmask 1043456
    %v151 = vsel %vm149, %v122, 0
    %v154 = vsel %vm149, %v123, 0
    %156 = vmatprep.subr.bf16.mxu0 %v154
    %157 = vmatpush1.bf16.msra.mxu0 %v151
    %158 = vmatprep.subr.bf16.mxu0 0
    %159 = vmatpush1.bf16.msra.mxu0 0
    %160 = vmatprep.subr.bf16.mxu0 0
    %161 = vmatpush1.bf16.msra.mxu0 0
    %162 = vmatprep.subr.bf16.mxu0 0
    %163 = vmatpush1.bf16.msra.mxu0 0
    %164 = vmatprep.subr.bf16.mxu0 0
    %165 = vmatpush1.bf16.msra.mxu0 0
    %166 = vmatprep.subr.bf16.mxu0 0
    %167 = vmatpush1.bf16.msra.mxu0 0
    %168 = vmatprep.subr.bf16.mxu0 0
    %169 = vmatpush1.bf16.msra.mxu0 0
    %170 = vmatprep.subr.bf16.mxu0 0
    %171 = vmatpush1.bf16.msra.mxu0 0
    %172 = vmatprep.subr.bf16.mxu0 0
    %173 = vmatpush1.bf16.msra.mxu0 0
    %174 = vmatprep.subr.bf16.mxu0 0
    %175 = vmatpush1.bf16.msra.mxu0 0
    %176 = vmatprep.subr.bf16.mxu0 0
    %177 = vmatpush1.bf16.msra.mxu0 0
    %178 = vmatprep.subr.bf16.mxu0 0
    %179 = vmatpush1.bf16.msra.mxu0 0
    %180 = vmatprep.subr.bf16.mxu0 0
    %181 = vmatpush1.bf16.msra.mxu0 0
    %182 = vmatprep.subr.bf16.mxu0 0
    %183 = vmatpush1.bf16.msra.mxu0 0
    %184 = vmatprep.subr.bf16.mxu0 0
    %185 = vmatpush1.bf16.msra.mxu0 0
    %186 = vmatprep.subr.bf16.mxu0 0
    %187 = vmatpush1.bf16.msra.mxu0 0
    %188 = vmatprep.mubr.bf16.mxu0 0
    %189 = vmatmul.mubr.bf16.gmra.mrb[0].mxu0 %v126
    %v190 = vpop.f32.mrb[0].mxu0
    %v191 = vadd.f32 0.0, %v190
    %v192 = vpop.f32.mrb[0].mxu0
    %v193 = vadd.f32 0.0, %v192
    %v194 = vpop.f32.mrb[0].mxu0
    %v195 = vadd.f32 0.0, %v194
    %v196 = vpop.f32.mrb[0].mxu0
    %v197 = vadd.f32 0.0, %v196
    %198 = vmatprep.mubr.bf16.mxu0 0
    %199 = vmatmul.mubr.bf16.gmra.mrb[0].mxu0 %v129
    %v200 = vpop.f32.mrb[0].mxu0
    %v201 = vadd.f32 0.0, %v200
    %v202 = vpop.f32.mrb[0].mxu0
    %v203 = vadd.f32 0.0, %v202
    %v204 = vpop.f32.mrb[0].mxu0
    %v205 = vadd.f32 0.0, %v204
    %v206 = vpop.f32.mrb[0].mxu0
    %v207 = vadd.f32 0.0, %v206
    %208 = vmatprep.mubr.bf16.mxu0 0
    %209 = vmatmul.mubr.bf16.gmra.mrb[0].mxu0 %v132
    %v210 = vpop.f32.mrb[0].mxu0
    %v211 = vadd.f32 0.0, %v210
    %v212 = vpop.f32.mrb[0].mxu0
    %v213 = vadd.f32 0.0, %v212
    %v214 = vpop.f32.mrb[0].mxu0
    %v215 = vadd.f32 0.0, %v214
    %v216 = vpop.f32.mrb[0].mxu0
    %v217 = vadd.f32 0.0, %v216
    %218 = vmatprep.mubr.bf16.mxu0 0
    %219 = vmatmul.mubr.bf16.gmra.mrb[0].mxu0 %v135
    %v220 = vpop.f32.mrb[0].mxu0
    %v221 = vadd.f32 0.0, %v220
    %v222 = vpop.f32.mrb[0].mxu0
    %v223 = vadd.f32 0.0, %v222
    %v224 = vpop.f32.mrb[0].mxu0
    %v225 = vadd.f32 0.0, %v224
    %v226 = vpop.f32.mrb[0].mxu0
    %v227 = vadd.f32 0.0, %v226
    %228 = vmatprep.mubr.bf16.mxu0 0
    %229 = vmatmul.mubr.bf16.gmra.mrb[0].mxu0 %v138
    %v230 = vpop.f32.mrb[0].mxu0
    %v231 = vadd.f32 0.0, %v230
    %v232 = vpop.f32.mrb[0].mxu0
    %v233 = vadd.f32 0.0, %v232
    %v234 = vpop.f32.mrb[0].mxu0
    %v235 = vadd.f32 0.0, %v234
    %v236 = vpop.f32.mrb[0].mxu0
    %v237 = vadd.f32 0.0, %v236
    %238 = vmatprep.mubr.bf16.mxu0 0
    %239 = vmatmul.mubr.bf16.gmra.mrb[0].mxu0 %v141
    %v240 = vpop.f32.mrb[0].mxu0
    %v241 = vadd.f32 0.0, %v240
    %v242 = vpop.f32.mrb[0].mxu0
    %v243 = vadd.f32 0.0, %v242
    %v244 = vpop.f32.mrb[0].mxu0
    %v245 = vadd.f32 0.0, %v244
    %v246 = vpop.f32.mrb[0].mxu0
    %v247 = vadd.f32 0.0, %v246
    %248 = vmatprep.mubr.bf16.mxu0 0
    %249 = vmatmul.mubr.bf16.gmra.mrb[0].mxu0 %v144
    %v250 = vpop.f32.mrb[0].mxu0
    %v251 = vadd.f32 0.0, %v250
    %v252 = vpop.f32.mrb[0].mxu0
    %v253 = vadd.f32 0.0, %v252
    %v254 = vpop.f32.mrb[0].mxu0
    %v255 = vadd.f32 0.0, %v254
    %v256 = vpop.f32.mrb[0].mxu0
    %v257 = vadd.f32 0.0, %v256
    %258 = vmatprep.mubr.bf16.mxu0 0
    %259 = vmatmul.mubr.bf16.gmra.mrb[0].mxu0 %v147
    %v260 = vpop.f32.mrb[0].mxu0
    %v261 = vadd.f32 0.0, %v260
    %v262 = vpop.f32.mrb[0].mxu0
    %v263 = vadd.f32 0.0, %v262
    %v264 = vpop.f32.mrb[0].mxu0
    %v265 = vadd.f32 0.0, %v264
    %v266 = vpop.f32.mrb[0].mxu0
    %v267 = vadd.f32 0.0, %v266
    %268 = vdwg.mxu0
    %v272 = vunpack.c.l.b16 %v115
    %v273 = vunpack.c.h.b16 %v115
    %v274 = vunpack.c.l.b16 %v116
    %v275 = vunpack.c.h.b16 %v116
    %v276 = vunpack.c.l.b16 %v117
    %v277 = vunpack.c.h.b16 %v117
    %v278 = vpack.c.b16 %v274, %v272
    %v279 = vpack.c.b16 %v275, %v273
    %v280 = vpack.c.b16 %v276, %v276
    %v281 = vpack.c.b16 %v277, %v277
    %vm284 = vcmask 195584
    %v286 = vsel %vm284, %v83, 0
    %v289 = vsel %vm284, %v84, 0
    %v292 = vsel %vm284, %v85, 0
    %v295 = vsel %vm284, %v86, 0
    %v298 = vsel %vm284, %v87, 0
    %v301 = vsel %vm284, %v88, 0
    %v304 = vsel %vm284, %v89, 0
    %v307 = vsel %vm284, %v90, 0
    %v310 = vsel %vm149, %v280, 0
    %v313 = vsel %vm149, %v281, 0
    %315 = vmatprep.subr.bf16.mxu0 %v279
    %316 = vmatpush1.bf16.msra.mxu0 %v278
    %317 = vmatprep.subr.bf16.mxu0 %v313
    %318 = vmatpush1.bf16.msra.mxu0 %v310
    %319 = vmatprep.subr.bf16.mxu0 0
    %320 = vmatpush1.bf16.msra.mxu0 0
    %321 = vmatprep.subr.bf16.mxu0 0
    %322 = vmatpush1.bf16.msra.mxu0 0
    %323 = vmatprep.subr.bf16.mxu0 0
    %324 = vmatpush1.bf16.msra.mxu0 0
    %325 = vmatprep.subr.bf16.mxu0 0
    %326 = vmatpush1.bf16.msra.mxu0 0
    %327 = vmatprep.subr.bf16.mxu0 0
    %328 = vmatpush1.bf16.msra.mxu0 0
    %329 = vmatprep.subr.bf16.mxu0 0
    %330 = vmatpush1.bf16.msra.mxu0 0
    %331 = vmatprep.subr.bf16.mxu0 0
    %332 = vmatpush1.bf16.msra.mxu0 0
    %333 = vmatprep.subr.bf16.mxu0 0
    %334 = vmatpush1.bf16.msra.mxu0 0
    %335 = vmatprep.subr.bf16.mxu0 0
    %336 = vmatpush1.bf16.msra.mxu0 0
    %337 = vmatprep.subr.bf16.mxu0 0
    %338 = vmatpush1.bf16.msra.mxu0 0
    %339 = vmatprep.subr.bf16.mxu0 0
    %340 = vmatpush1.bf16.msra.mxu0 0
    %341 = vmatprep.subr.bf16.mxu0 0
    %342 = vmatpush1.bf16.msra.mxu0 0
    %343 = vmatprep.subr.bf16.mxu0 0
    %344 = vmatpush1.bf16.msra.mxu0 0
    %345 = vmatprep.subr.bf16.mxu0 0
    %346 = vmatpush1.bf16.msra.mxu0 0
    %347 = vmatprep.mubr.bf16.mxu0 0
    %348 = vmatmul.mubr.bf16.gmra.mrb[0].mxu0 %v286
    %v349 = vpop.f32.mrb[0].mxu0
    %v350 = vadd.f32 %v191, %v349
    %v351 = vpop.f32.mrb[0].mxu0
    %v352 = vadd.f32 %v193, %v351
    %v353 = vpop.f32.mrb[0].mxu0
    %v354 = vadd.f32 %v195, %v353
    %v355 = vpop.f32.mrb[0].mxu0
    %v356 = vadd.f32 %v197, %v355
    %357 = vmatprep.mubr.bf16.mxu0 0
    %358 = vmatmul.mubr.bf16.gmra.mrb[0].mxu0 %v289
    %v359 = vpop.f32.mrb[0].mxu0
    %v360 = vadd.f32 %v201, %v359
    %v361 = vpop.f32.mrb[0].mxu0
    %v362 = vadd.f32 %v203, %v361
    %v363 = vpop.f32.mrb[0].mxu0
    %v364 = vadd.f32 %v205, %v363
    %v365 = vpop.f32.mrb[0].mxu0
    %v366 = vadd.f32 %v207, %v365
    %367 = vmatprep.mubr.bf16.mxu0 0
    %368 = vmatmul.mubr.bf16.gmra.mrb[0].mxu0 %v292
    %v369 = vpop.f32.mrb[0].mxu0
    %v370 = vadd.f32 %v211, %v369
    %v371 = vpop.f32.mrb[0].mxu0
    %v372 = vadd.f32 %v213, %v371
    %v373 = vpop.f32.mrb[0].mxu0
    %v374 = vadd.f32 %v215, %v373
    %v375 = vpop.f32.mrb[0].mxu0
    %v376 = vadd.f32 %v217, %v375
    %377 = vmatprep.mubr.bf16.mxu0 0
    %378 = vmatmul.mubr.bf16.gmra.mrb[0].mxu0 %v295
    %v379 = vpop.f32.mrb[0].mxu0
    %v380 = vadd.f32 %v221, %v379
    %v381 = vpop.f32.mrb[0].mxu0
    %v382 = vadd.f32 %v223, %v381
    %v383 = vpop.f32.mrb[0].mxu0
    %v384 = vadd.f32 %v225, %v383
    %v385 = vpop.f32.mrb[0].mxu0
    %v386 = vadd.f32 %v227, %v385
    %387 = vmatprep.mubr.bf16.mxu0 0
    %388 = vmatmul.mubr.bf16.gmra.mrb[0].mxu0 %v298
    %v389 = vpop.f32.mrb[0].mxu0
    %v390 = vadd.f32 %v231, %v389
    %v391 = vpop.f32.mrb[0].mxu0
    %v392 = vadd.f32 %v233, %v391
    %v393 = vpop.f32.mrb[0].mxu0
    %v394 = vadd.f32 %v235, %v393
    %v395 = vpop.f32.mrb[0].mxu0
    %v396 = vadd.f32 %v237, %v395
    %397 = vmatprep.mubr.bf16.mxu0 0
    %398 = vmatmul.mubr.bf16.gmra.mrb[0].mxu0 %v301
    %v399 = vpop.f32.mrb[0].mxu0
    %v400 = vadd.f32 %v241, %v399
    %v401 = vpop.f32.mrb[0].mxu0
    %v402 = vadd.f32 %v243, %v401
    %v403 = vpop.f32.mrb[0].mxu0
    %v404 = vadd.f32 %v245, %v403
    %v405 = vpop.f32.mrb[0].mxu0
    %v406 = vadd.f32 %v247, %v405
    %407 = vmatprep.mubr.bf16.mxu0 0
    %408 = vmatmul.mubr.bf16.gmra.mrb[0].mxu0 %v304
    %v409 = vpop.f32.mrb[0].mxu0
    %v410 = vadd.f32 %v251, %v409
    %v411 = vpop.f32.mrb[0].mxu0
    %v412 = vadd.f32 %v253, %v411
    %v413 = vpop.f32.mrb[0].mxu0
    %v414 = vadd.f32 %v255, %v413
    %v415 = vpop.f32.mrb[0].mxu0
    %v416 = vadd.f32 %v257, %v415
    %417 = vmatprep.mubr.bf16.mxu0 0
    %418 = vmatmul.mubr.bf16.gmra.mrb[0].mxu0 %v307
    %v419 = vpop.f32.mrb[0].mxu0
    %v420 = vadd.f32 %v261, %v419
    %v421 = vpop.f32.mrb[0].mxu0
    %v422 = vadd.f32 %v263, %v421
    %v423 = vpop.f32.mrb[0].mxu0
    %v424 = vadd.f32 %v265, %v423
    %v425 = vpop.f32.mrb[0].mxu0
    %v426 = vadd.f32 %v267, %v425
    %427 = vdwg.mxu0
    %v428 = vld [vmem:[%s4] sm:$0x3]
    %v430 = vlaneseq
    %v431 = vshrl.u32 %v430, 7
    %v432 = vsub.s32 0, %v431
    %v433 = vrot.slane %v428, %v432
    %v434 = vlaneseq
    %v435 = vshrl.u32 %v434, 7
    %v436 = vsub.s32 1, %v435
    %v437 = vrot.slane %v428, %v436
    %v440 = vadd.f32 %v350, %v433
    %v441 = vadd.f32 %v352, %v437
    %v442 = vadd.f32 %v354, %v433
    %v443 = vadd.f32 %v356, %v437
    %v444 = vadd.f32 %v360, %v433
    %v445 = vadd.f32 %v362, %v437
    %v446 = vadd.f32 %v364, %v433
    %v447 = vadd.f32 %v366, %v437
    %v448 = vadd.f32 %v370, %v433
    %v449 = vadd.f32 %v372, %v437
    %v450 = vadd.f32 %v374, %v433
    %v451 = vadd.f32 %v376, %v437
    %v452 = vadd.f32 %v380, %v433
    %v453 = vadd.f32 %v382, %v437
    %v454 = vadd.f32 %v384, %v433
    %v455 = vadd.f32 %v386, %v437
    %v456 = vadd.f32 %v390, %v433
    %v457 = vadd.f32 %v392, %v437
    %v458 = vadd.f32 %v394, %v433
    %v459 = vadd.f32 %v396, %v437
    %v460 = vadd.f32 %v400, %v433
    %v461 = vadd.f32 %v402, %v437
    %v462 = vadd.f32 %v404, %v433
    %v463 = vadd.f32 %v406, %v437
    %v464 = vadd.f32 %v410, %v433
    %v465 = vadd.f32 %v412, %v437
    %v466 = vadd.f32 %v414, %v433
    %v467 = vadd.f32 %v416, %v437
    %v468 = vadd.f32 %v420, %v433
    %v469 = vadd.f32 %v422, %v437
    %v470 = vadd.f32 %v424, %v433
    %v471 = vadd.f32 %v426, %v437
    %v472 = vmax.f32 %v440, 0.0
    %v473 = vmax.f32 %v441, 0.0
    %v474 = vmax.f32 %v442, 0.0
    %v475 = vmax.f32 %v443, 0.0
    %v476 = vmax.f32 %v444, 0.0
    %v477 = vmax.f32 %v445, 0.0
    %v478 = vmax.f32 %v446, 0.0
    %v479 = vmax.f32 %v447, 0.0
    %v480 = vmax.f32 %v448, 0.0
    %v481 = vmax.f32 %v449, 0.0
    %v482 = vmax.f32 %v450, 0.0
    %v483 = vmax.f32 %v451, 0.0
    %v484 = vmax.f32 %v452, 0.0
    %v485 = vmax.f32 %v453, 0.0
    %v486 = vmax.f32 %v454, 0.0
    %v487 = vmax.f32 %v455, 0.0
    %v488 = vmax.f32 %v456, 0.0
    %v489 = vmax.f32 %v457, 0.0
    %v490 = vmax.f32 %v458, 0.0
    %v491 = vmax.f32 %v459, 0.0
    %v492 = vmax.f32 %v460, 0.0
    %v493 = vmax.f32 %v461, 0.0
    %v494 = vmax.f32 %v462, 0.0
    %v495 = vmax.f32 %v463, 0.0
    %v496 = vmax.f32 %v464, 0.0
    %v497 = vmax.f32 %v465, 0.0
    %v498 = vmax.f32 %v466, 0.0
    %v499 = vmax.f32 %v467, 0.0
    %v500 = vmax.f32 %v468, 0.0
    %v501 = vmax.f32 %v469, 0.0
    %v502 = vmax.f32 %v470, 0.0
    %v503 = vmax.f32 %v471, 0.0
    %v504 = vpack.c.bf16 %v474, %v472
    %v505 = vpack.c.bf16 %v475, %v473
    %v506 = vpack.c.bf16 %v478, %v476
    %v507 = vpack.c.bf16 %v479, %v477
    %v508 = vpack.c.bf16 %v482, %v480
    %v509 = vpack.c.bf16 %v483, %v481
    %v510 = vpack.c.bf16 %v486, %v484
    %v511 = vpack.c.bf16 %v487, %v485
    %v512 = vpack.c.bf16 %v490, %v488
    %v513 = vpack.c.bf16 %v491, %v489
    %v514 = vpack.c.bf16 %v494, %v492
    %v515 = vpack.c.bf16 %v495, %v493
    %v516 = vpack.c.bf16 %v498, %v496
    %v517 = vpack.c.bf16 %v499, %v497
    %v518 = vpack.c.bf16 %v502, %v500
    %v519 = vpack.c.bf16 %v503, %v501
    %v520 = vld [vmem:[%s5] sm:$0xff]
    %v521 = vld [vmem:[%s5 + $0x8] sm:$0xff]
    %v522 = vld [vmem:[%s5 + $0x10] sm:$0xff]
    %v523 = vld [vmem:[%s5 + $0x18] sm:$0xff]
    %v524 = vld [vmem:[%s5 + $0x20] sm:$0xff]
    %v525 = vld [vmem:[%s5 + $0x28] sm:$0xff]
    %v526 = vld [vmem:[%s5 + $0x30] sm:$0xff]
    %v527 = vld [vmem:[%s5 + $0x38] sm:$0xff]
    %v528 = vld [vmem:[%s5 + $0x40] sm:$0xff]
    %v529 = vld [vmem:[%s5 + $0x48] sm:$0xff]
    %v530 = vld [vmem:[%s5 + $0x50] sm:$0xff]
    %v531 = vld [vmem:[%s5 + $0x58] sm:$0xff]
    %v532 = vld [vmem:[%s5 + $0x60] sm:$0xff]
    %v533 = vld [vmem:[%s5 + $0x68] sm:$0xff]
    %v534 = vld [vmem:[%s5 + $0x70] sm:$0xff]
    %v535 = vld [vmem:[%s5 + $0x78] sm:$0xff]
    %v536 = vld [vmem:[%s5 + $0x80] sm:$0xff]
    %v537 = vld [vmem:[%s5 + $0x88] sm:$0xff]
    %v538 = vld [vmem:[%s5 + $0x90] sm:$0xff]
    %v539 = vld [vmem:[%s5 + $0x98] sm:$0xff]
    %v540 = vld [vmem:[%s5 + $0xa0] sm:$0xff]
    %v541 = vld [vmem:[%s5 + $0xa8] sm:$0xff]
    %v542 = vld [vmem:[%s5 + $0xb0] sm:$0xff]
    %v543 = vld [vmem:[%s5 + $0xb8] sm:$0xff]
    %v544 = vld [vmem:[%s5 + $0xc0] sm:$0xff]
    %v545 = vld [vmem:[%s5 + $0xc8] sm:$0xff]
    %v546 = vld [vmem:[%s5 + $0xd0] sm:$0xff]
    %v547 = vld [vmem:[%s5 + $0xd8] sm:$0xff]
    %v548 = vld [vmem:[%s5 + $0xe0] sm:$0xff]
    %v549 = vld [vmem:[%s5 + $0xe8] sm:$0xff]
    %v550 = vld [vmem:[%s5 + $0xf0] sm:$0xff]
    %v551 = vld [vmem:[%s5 + $0xf8] sm:$0xff]
    %v552 = vld [vmem:[%s6] sm:$0x3]
    %v554 = vlaneseq
    %v555 = vshrl.u32 %v554, 7
    %v556 = vsub.s32 0, %v555
    %v557 = vrot.slane %v552, %v556
    %v558 = vlaneseq
    %v559 = vshrl.u32 %v558, 7
    %v560 = vsub.s32 1, %v559
    %v561 = vrot.slane %v552, %v560
    %v596 = vunpack.c.l.b16 %v520
    %v597 = vunpack.c.h.b16 %v520
    %v598 = vunpack.c.l.b16 %v521
    %v599 = vunpack.c.h.b16 %v521
    %v600 = vunpack.c.l.b16 %v522
    %v601 = vunpack.c.h.b16 %v522
    %v602 = vunpack.c.l.b16 %v523
    %v603 = vunpack.c.h.b16 %v523
    %v604 = vunpack.c.l.b16 %v524
    %v605 = vunpack.c.h.b16 %v524
    %v606 = vunpack.c.l.b16 %v525
    %v607 = vunpack.c.h.b16 %v525
    %v608 = vunpack.c.l.b16 %v526
    %v609 = vunpack.c.h.b16 %v526
    %v610 = vunpack.c.l.b16 %v527
    %v611 = vunpack.c.h.b16 %v527
    %v612 = vunpack.c.l.b16 %v528
    %v613 = vunpack.c.h.b16 %v528
    %v614 = vunpack.c.l.b16 %v529
    %v615 = vunpack.c.h.b16 %v529
    %v616 = vunpack.c.l.b16 %v530
    %v617 = vunpack.c.h.b16 %v530
    %v618 = vunpack.c.l.b16 %v531
    %v619 = vunpack.c.h.b16 %v531
    %v620 = vunpack.c.l.b16 %v532
    %v621 = vunpack.c.h.b16 %v532
    %v622 = vunpack.c.l.b16 %v533
    %v623 = vunpack.c.h.b16 %v533
    %v624 = vunpack.c.l.b16 %v534
    %v625 = vunpack.c.h.b16 %v534
    %v626 = vunpack.c.l.b16 %v535
    %v627 = vunpack.c.h.b16 %v535
    %v628 = vunpack.c.l.b16 %v536
    %v629 = vunpack.c.h.b16 %v536
    %v630 = vunpack.c.l.b16 %v537
    %v631 = vunpack.c.h.b16 %v537
    %v632 = vunpack.c.l.b16 %v538
    %v633 = vunpack.c.h.b16 %v538
    %v634 = vunpack.c.l.b16 %v539
    %v635 = vunpack.c.h.b16 %v539
    %v636 = vunpack.c.l.b16 %v540
    %v637 = vunpack.c.h.b16 %v540
    %v638 = vunpack.c.l.b16 %v541
    %v639 = vunpack.c.h.b16 %v541
    %v640 = vunpack.c.l.b16 %v542
    %v641 = vunpack.c.h.b16 %v542
    %v642 = vunpack.c.l.b16 %v543
    %v643 = vunpack.c.h.b16 %v543
    %v644 = vunpack.c.l.b16 %v544
    %v645 = vunpack.c.h.b16 %v544
    %v646 = vunpack.c.l.b16 %v545
    %v647 = vunpack.c.h.b16 %v545
    %v648 = vunpack.c.l.b16 %v546
    %v649 = vunpack.c.h.b16 %v546
    %v650 = vunpack.c.l.b16 %v547
    %v651 = vunpack.c.h.b16 %v547
    %v652 = vunpack.c.l.b16 %v548
    %v653 = vunpack.c.h.b16 %v548
    %v654 = vunpack.c.l.b16 %v549
    %v655 = vunpack.c.h.b16 %v549
    %v656 = vunpack.c.l.b16 %v550
    %v657 = vunpack.c.h.b16 %v550
    %v658 = vunpack.c.l.b16 %v551
    %v659 = vunpack.c.h.b16 %v551
    %v660 = vpack.c.b16 %v598, %v596
    %v661 = vpack.c.b16 %v599, %v597
    %v662 = vpack.c.b16 %v602, %v600
    %v663 = vpack.c.b16 %v603, %v601
    %v664 = vpack.c.b16 %v606, %v604
    %v665 = vpack.c.b16 %v607, %v605
    %v666 = vpack.c.b16 %v610, %v608
    %v667 = vpack.c.b16 %v611, %v609
    %v668 = vpack.c.b16 %v614, %v612
    %v669 = vpack.c.b16 %v615, %v613
    %v670 = vpack.c.b16 %v618, %v616
    %v671 = vpack.c.b16 %v619, %v617
    %v672 = vpack.c.b16 %v622, %v620
    %v673 = vpack.c.b16 %v623, %v621
    %v674 = vpack.c.b16 %v626, %v624
    %v675 = vpack.c.b16 %v627, %v625
    %v676 = vpack.c.b16 %v630, %v628
    %v677 = vpack.c.b16 %v631, %v629
    %v678 = vpack.c.b16 %v634, %v632
    %v679 = vpack.c.b16 %v635, %v633
    %v680 = vpack.c.b16 %v638, %v636
    %v681 = vpack.c.b16 %v639, %v637
    %v682 = vpack.c.b16 %v642, %v640
    %v683 = vpack.c.b16 %v643, %v641
    %v684 = vpack.c.b16 %v646, %v644
    %v685 = vpack.c.b16 %v647, %v645
    %v686 = vpack.c.b16 %v650, %v648
    %v687 = vpack.c.b16 %v651, %v649
    %v688 = vpack.c.b16 %v654, %v652
    %v689 = vpack.c.b16 %v655, %v653
    %v690 = vpack.c.b16 %v658, %v656
    %v691 = vpack.c.b16 %v659, %v657
    %724 = vmatprep.subr.bf16.mxu0 %v661
    %725 = vmatpush1.bf16.msra.mxu0 %v660
    %726 = vmatprep.subr.bf16.mxu0 %v663
    %727 = vmatpush1.bf16.msra.mxu0 %v662
    %728 = vmatprep.subr.bf16.mxu0 %v665
    %729 = vmatpush1.bf16.msra.mxu0 %v664
    %730 = vmatprep.subr.bf16.mxu0 %v667
    %731 = vmatpush1.bf16.msra.mxu0 %v666
    %732 = vmatprep.subr.bf16.mxu0 %v669
    %733 = vmatpush1.bf16.msra.mxu0 %v668
    %734 = vmatprep.subr.bf16.mxu0 %v671
    %735 = vmatpush1.bf16.msra.mxu0 %v670
    %736 = vmatprep.subr.bf16.mxu0 %v673
    %737 = vmatpush1.bf16.msra.mxu0 %v672
    %738 = vmatprep.subr.bf16.mxu0 %v675
    %739 = vmatpush1.bf16.msra.mxu0 %v674
    %740 = vmatprep.subr.bf16.mxu0 %v677
    %741 = vmatpush1.bf16.msra.mxu0 %v676
    %742 = vmatprep.subr.bf16.mxu0 %v679
    %743 = vmatpush1.bf16.msra.mxu0 %v678
    %744 = vmatprep.subr.bf16.mxu0 %v681
    %745 = vmatpush1.bf16.msra.mxu0 %v680
    %746 = vmatprep.subr.bf16.mxu0 %v683
    %747 = vmatpush1.bf16.msra.mxu0 %v682
    %748 = vmatprep.subr.bf16.mxu0 %v685
    %749 = vmatpush1.bf16.msra.mxu0 %v684
    %750 = vmatprep.subr.bf16.mxu0 %v687
    %751 = vmatpush1.bf16.msra.mxu0 %v686
    %752 = vmatprep.subr.bf16.mxu0 %v689
    %753 = vmatpush1.bf16.msra.mxu0 %v688
    %754 = vmatprep.subr.bf16.mxu0 %v691
    %755 = vmatpush1.bf16.msra.mxu0 %v690
    %756 = vmatprep.mubr.bf16.mxu0 %v505
    %757 = vmatmul.mubr.bf16.gmra.mrb[0].mxu0 %v504
    %v758 = vpop.f32.mrb[0].mxu0
    %v759 = vadd.f32 %v557, %v758
    %v760 = vpop.f32.mrb[0].mxu0
    %v761 = vadd.f32 %v561, %v760
    %v762 = vpop.f32.mrb[0].mxu0
    %v763 = vadd.f32 %v557, %v762
    %v764 = vpop.f32.mrb[0].mxu0
    %v765 = vadd.f32 %v561, %v764
    %766 = vmatprep.mubr.bf16.mxu0 %v507
    %767 = vmatmul.mubr.bf16.gmra.mrb[0].mxu0 %v506
    %v768 = vpop.f32.mrb[0].mxu0
    %v769 = vadd.f32 %v557, %v768
    %v770 = vpop.f32.mrb[0].mxu0
    %v771 = vadd.f32 %v561, %v770
    %v772 = vpop.f32.mrb[0].mxu0
    %v773 = vadd.f32 %v557, %v772
    %v774 = vpop.f32.mrb[0].mxu0
    %v775 = vadd.f32 %v561, %v774
    %776 = vmatprep.mubr.bf16.mxu0 %v509
    %777 = vmatmul.mubr.bf16.gmra.mrb[0].mxu0 %v508
    %v778 = vpop.f32.mrb[0].mxu0
    %v779 = vadd.f32 %v557, %v778
    %v780 = vpop.f32.mrb[0].mxu0
    %v781 = vadd.f32 %v561, %v780
    %v782 = vpop.f32.mrb[0].mxu0
    %v783 = vadd.f32 %v557, %v782
    %v784 = vpop.f32.mrb[0].mxu0
    %v785 = vadd.f32 %v561, %v784
    %786 = vmatprep.mubr.bf16.mxu0 %v511
    %787 = vmatmul.mubr.bf16.gmra.mrb[0].mxu0 %v510
    %v788 = vpop.f32.mrb[0].mxu0
    %v789 = vadd.f32 %v557, %v788
    %v790 = vpop.f32.mrb[0].mxu0
    %v791 = vadd.f32 %v561, %v790
    %v792 = vpop.f32.mrb[0].mxu0
    %v793 = vadd.f32 %v557, %v792
    %v794 = vpop.f32.mrb[0].mxu0
    %v795 = vadd.f32 %v561, %v794
    %796 = vmatprep.mubr.bf16.mxu0 %v513
    %797 = vmatmul.mubr.bf16.gmra.mrb[0].mxu0 %v512
    %v798 = vpop.f32.mrb[0].mxu0
    %v799 = vadd.f32 %v557, %v798
    %v800 = vpop.f32.mrb[0].mxu0
    %v801 = vadd.f32 %v561, %v800
    %v802 = vpop.f32.mrb[0].mxu0
    %v803 = vadd.f32 %v557, %v802
    %v804 = vpop.f32.mrb[0].mxu0
    %v805 = vadd.f32 %v561, %v804
    %806 = vmatprep.mubr.bf16.mxu0 %v515
    %807 = vmatmul.mubr.bf16.gmra.mrb[0].mxu0 %v514
    %v808 = vpop.f32.mrb[0].mxu0
    %v809 = vadd.f32 %v557, %v808
    %v810 = vpop.f32.mrb[0].mxu0
    %v811 = vadd.f32 %v561, %v810
    %v812 = vpop.f32.mrb[0].mxu0
    %v813 = vadd.f32 %v557, %v812
    %v814 = vpop.f32.mrb[0].mxu0
    %v815 = vadd.f32 %v561, %v814
    %816 = vmatprep.mubr.bf16.mxu0 %v517
    %817 = vmatmul.mubr.bf16.gmra.mrb[0].mxu0 %v516
    %v818 = vpop.f32.mrb[0].mxu0
    %v819 = vadd.f32 %v557, %v818
    %v820 = vpop.f32.mrb[0].mxu0
    %v821 = vadd.f32 %v561, %v820
    %v822 = vpop.f32.mrb[0].mxu0
    %v823 = vadd.f32 %v557, %v822
    %v824 = vpop.f32.mrb[0].mxu0
    %v825 = vadd.f32 %v561, %v824
    %826 = vmatprep.mubr.bf16.mxu0 %v519
    %827 = vmatmul.mubr.bf16.gmra.mrb[0].mxu0 %v518
    %v828 = vpop.f32.mrb[0].mxu0
    %v829 = vadd.f32 %v557, %v828
    %v830 = vpop.f32.mrb[0].mxu0
    %v831 = vadd.f32 %v561, %v830
    %v832 = vpop.f32.mrb[0].mxu0
    %v833 = vadd.f32 %v557, %v832
    %v834 = vpop.f32.mrb[0].mxu0
    %v835 = vadd.f32 %v561, %v834
    %836 = vdwg.mxu0
    %v837 = vmax.f32 %v759, 0.0
    %v838 = vmax.f32 %v761, 0.0
    %v839 = vmax.f32 %v763, 0.0
    %v840 = vmax.f32 %v765, 0.0
    %v841 = vmax.f32 %v769, 0.0
    %v842 = vmax.f32 %v771, 0.0
    %v843 = vmax.f32 %v773, 0.0
    %v844 = vmax.f32 %v775, 0.0
    %v845 = vmax.f32 %v779, 0.0
    %v846 = vmax.f32 %v781, 0.0
    %v847 = vmax.f32 %v783, 0.0
    %v848 = vmax.f32 %v785, 0.0
    %v849 = vmax.f32 %v789, 0.0
    %v850 = vmax.f32 %v791, 0.0
    %v851 = vmax.f32 %v793, 0.0
    %v852 = vmax.f32 %v795, 0.0
    %v853 = vmax.f32 %v799, 0.0
    %v854 = vmax.f32 %v801, 0.0
    %v855 = vmax.f32 %v803, 0.0
    %v856 = vmax.f32 %v805, 0.0
    %v857 = vmax.f32 %v809, 0.0
    %v858 = vmax.f32 %v811, 0.0
    %v859 = vmax.f32 %v813, 0.0
    %v860 = vmax.f32 %v815, 0.0
    %v861 = vmax.f32 %v819, 0.0
    %v862 = vmax.f32 %v821, 0.0
    %v863 = vmax.f32 %v823, 0.0
    %v864 = vmax.f32 %v825, 0.0
    %v865 = vmax.f32 %v829, 0.0
    %v866 = vmax.f32 %v831, 0.0
    %v867 = vmax.f32 %v833, 0.0
    %v868 = vmax.f32 %v835, 0.0
    %v869 = vpack.c.bf16 %v839, %v837
    %v870 = vpack.c.bf16 %v840, %v838
    %v871 = vpack.c.bf16 %v843, %v841
    %v872 = vpack.c.bf16 %v844, %v842
    %v873 = vpack.c.bf16 %v847, %v845
    %v874 = vpack.c.bf16 %v848, %v846
    %v875 = vpack.c.bf16 %v851, %v849
    %v876 = vpack.c.bf16 %v852, %v850
    %v877 = vpack.c.bf16 %v855, %v853
    %v878 = vpack.c.bf16 %v856, %v854
    %v879 = vpack.c.bf16 %v859, %v857
    %v880 = vpack.c.bf16 %v860, %v858
    %v881 = vpack.c.bf16 %v863, %v861
    %v882 = vpack.c.bf16 %v864, %v862
    %v883 = vpack.c.bf16 %v867, %v865
    %v884 = vpack.c.bf16 %v868, %v866
    %v885 = vld [vmem:[#allocation2] sm:$0xff]
    %v886 = vld [vmem:[#allocation2 + $0x8] sm:$0xff]
    %v887 = vld [vmem:[#allocation2 + $0x10] sm:$0xff]
    %v888 = vld [vmem:[#allocation2 + $0x18] sm:$0xff]
    %v889 = vld [vmem:[#allocation2 + $0x20] sm:$0xff]
    %v890 = vld [vmem:[#allocation2 + $0x28] sm:$0xff]
    %v891 = vld [vmem:[#allocation2 + $0x30] sm:$0xff]
    %v892 = vld [vmem:[#allocation2 + $0x38] sm:$0xff]
    %v893 = vld [vmem:[#allocation2 + $0x40] sm:$0xff]
    %v894 = vld [vmem:[#allocation2 + $0x48] sm:$0xff]
    %v895 = vld [vmem:[#allocation2 + $0x50] sm:$0xff]
    %v896 = vld [vmem:[#allocation2 + $0x58] sm:$0xff]
    %v897 = vld [vmem:[#allocation2 + $0x60] sm:$0xff]
    %v898 = vld [vmem:[#allocation2 + $0x68] sm:$0xff]
    %v899 = vld [vmem:[#allocation2 + $0x70] sm:$0xff]
    %v900 = vld [vmem:[#allocation2 + $0x78] sm:$0xff]
    %v901 = vld [vmem:[#allocation2 + $0x80] sm:$0xff]
    %v902 = vld [vmem:[#allocation2 + $0x88] sm:$0xff]
    %v903 = vld [vmem:[#allocation2 + $0x90] sm:$0xff]
    %v904 = vld [vmem:[#allocation2 + $0x98] sm:$0xff]
    %v905 = vld [vmem:[#allocation2 + $0xa0] sm:$0xff]
    %v906 = vld [vmem:[#allocation2 + $0xa8] sm:$0xff]
    %v907 = vld [vmem:[#allocation2 + $0xb0] sm:$0xff]
    %v908 = vld [vmem:[#allocation2 + $0xb8] sm:$0xff]
    %v909 = vld [vmem:[#allocation2 + $0xc0] sm:$0xff]
    %v910 = vld [vmem:[#allocation2 + $0xc8] sm:$0xff]
    %v911 = vld [vmem:[#allocation2 + $0xd0] sm:$0xff]
    %v912 = vld [vmem:[#allocation2 + $0xd8] sm:$0xff]
    %v913 = vld [vmem:[#allocation2 + $0xe0] sm:$0xff]
    %v914 = vld [vmem:[#allocation2 + $0xe8] sm:$0xff]
    %v915 = vld [vmem:[#allocation2 + $0xf0] sm:$0xff]
    %v916 = vld [vmem:[#allocation2 + $0xf8] sm:$0xff]
    %v917 = vld [vmem:[%s8] sm:$0x3]
    %v919 = vlaneseq
    %v920 = vshrl.u32 %v919, 7
    %v921 = vsub.s32 0, %v920
    %v922 = vrot.slane %v917, %v921
    %v923 = vlaneseq
    %v924 = vshrl.u32 %v923, 7
    %v925 = vsub.s32 1, %v924
    %v926 = vrot.slane %v917, %v925
    %v961 = vunpack.c.l.b16 %v885
    %v962 = vunpack.c.h.b16 %v885
    %v963 = vunpack.c.l.b16 %v886
    %v964 = vunpack.c.h.b16 %v886
    %v965 = vunpack.c.l.b16 %v887
    %v966 = vunpack.c.h.b16 %v887
    %v967 = vunpack.c.l.b16 %v888
    %v968 = vunpack.c.h.b16 %v888
    %v969 = vunpack.c.l.b16 %v889
    %v970 = vunpack.c.h.b16 %v889
    %v971 = vunpack.c.l.b16 %v890
    %v972 = vunpack.c.h.b16 %v890
    %v973 = vunpack.c.l.b16 %v891
    %v974 = vunpack.c.h.b16 %v891
    %v975 = vunpack.c.l.b16 %v892
    %v976 = vunpack.c.h.b16 %v892
    %v977 = vunpack.c.l.b16 %v893
    %v978 = vunpack.c.h.b16 %v893
    %v979 = vunpack.c.l.b16 %v894
    %v980 = vunpack.c.h.b16 %v894
    %v981 = vunpack.c.l.b16 %v895
    %v982 = vunpack.c.h.b16 %v895
    %v983 = vunpack.c.l.b16 %v896
    %v984 = vunpack.c.h.b16 %v896
    %v985 = vunpack.c.l.b16 %v897
    %v986 = vunpack.c.h.b16 %v897
    %v987 = vunpack.c.l.b16 %v898
    %v988 = vunpack.c.h.b16 %v898
    %v989 = vunpack.c.l.b16 %v899
    %v990 = vunpack.c.h.b16 %v899
    %v991 = vunpack.c.l.b16 %v900
    %v992 = vunpack.c.h.b16 %v900
    %v993 = vunpack.c.l.b16 %v901
    %v994 = vunpack.c.h.b16 %v901
    %v995 = vunpack.c.l.b16 %v902
    %v996 = vunpack.c.h.b16 %v902
    %v997 = vunpack.c.l.b16 %v903
    %v998 = vunpack.c.h.b16 %v903
    %v999 = vunpack.c.l.b16 %v904
    %v1000 = vunpack.c.h.b16 %v904
    %v1001 = vunpack.c.l.b16 %v905
    %v1002 = vunpack.c.h.b16 %v905
    %v1003 = vunpack.c.l.b16 %v906
    %v1004 = vunpack.c.h.b16 %v906
    %v1005 = vunpack.c.l.b16 %v907
    %v1006 = vunpack.c.h.b16 %v907
    %v1007 = vunpack.c.l.b16 %v908
    %v1008 = vunpack.c.h.b16 %v908
    %v1009 = vunpack.c.l.b16 %v909
    %v1010 = vunpack.c.h.b16 %v909
    %v1011 = vunpack.c.l.b16 %v910
    %v1012 = vunpack.c.h.b16 %v910
    %v1013 = vunpack.c.l.b16 %v911
    %v1014 = vunpack.c.h.b16 %v911
    %v1015 = vunpack.c.l.b16 %v912
    %v1016 = vunpack.c.h.b16 %v912
    %v1017 = vunpack.c.l.b16 %v913
    %v1018 = vunpack.c.h.b16 %v913
    %v1019 = vunpack.c.l.b16 %v914
    %v1020 = vunpack.c.h.b16 %v914
    %v1021 = vunpack.c.l.b16 %v915
    %v1022 = vunpack.c.h.b16 %v915
    %v1023 = vunpack.c.l.b16 %v916
    %v1024 = vunpack.c.h.b16 %v916
    %v1025 = vpack.c.b16 %v963, %v961
    %v1026 = vpack.c.b16 %v964, %v962
    %v1027 = vpack.c.b16 %v967, %v965
    %v1028 = vpack.c.b16 %v968, %v966
    %v1029 = vpack.c.b16 %v971, %v969
    %v1030 = vpack.c.b16 %v972, %v970
    %v1031 = vpack.c.b16 %v975, %v973
    %v1032 = vpack.c.b16 %v976, %v974
    %v1033 = vpack.c.b16 %v979, %v977
    %v1034 = vpack.c.b16 %v980, %v978
    %v1035 = vpack.c.b16 %v983, %v981
    %v1036 = vpack.c.b16 %v984, %v982
    %v1037 = vpack.c.b16 %v987, %v985
    %v1038 = vpack.c.b16 %v988, %v986
    %v1039 = vpack.c.b16 %v991, %v989
    %v1040 = vpack.c.b16 %v992, %v990
    %v1041 = vpack.c.b16 %v995, %v993
    %v1042 = vpack.c.b16 %v996, %v994
    %v1043 = vpack.c.b16 %v999, %v997
    %v1044 = vpack.c.b16 %v1000, %v998
    %v1045 = vpack.c.b16 %v1003, %v1001
    %v1046 = vpack.c.b16 %v1004, %v1002
    %v1047 = vpack.c.b16 %v1007, %v1005
    %v1048 = vpack.c.b16 %v1008, %v1006
    %v1049 = vpack.c.b16 %v1011, %v1009
    %v1050 = vpack.c.b16 %v1012, %v1010
    %v1051 = vpack.c.b16 %v1015, %v1013
    %v1052 = vpack.c.b16 %v1016, %v1014
    %v1053 = vpack.c.b16 %v1019, %v1017
    %v1054 = vpack.c.b16 %v1020, %v1018
    %v1055 = vpack.c.b16 %v1023, %v1021
    %v1056 = vpack.c.b16 %v1024, %v1022
    %1089 = vmatprep.subr.bf16.mxu0 %v1026
    %1090 = vmatpush1.bf16.msra.mxu0 %v1025
    %1091 = vmatprep.subr.bf16.mxu0 %v1028
    %1092 = vmatpush1.bf16.msra.mxu0 %v1027
    %1093 = vmatprep.subr.bf16.mxu0 %v1030
    %1094 = vmatpush1.bf16.msra.mxu0 %v1029
    %1095 = vmatprep.subr.bf16.mxu0 %v1032
    %1096 = vmatpush1.bf16.msra.mxu0 %v1031
    %1097 = vmatprep.subr.bf16.mxu0 %v1034
    %1098 = vmatpush1.bf16.msra.mxu0 %v1033
    %1099 = vmatprep.subr.bf16.mxu0 %v1036
    %1100 = vmatpush1.bf16.msra.mxu0 %v1035
    %1101 = vmatprep.subr.bf16.mxu0 %v1038
    %1102 = vmatpush1.bf16.msra.mxu0 %v1037
    %1103 = vmatprep.subr.bf16.mxu0 %v1040
    %1104 = vmatpush1.bf16.msra.mxu0 %v1039
    %1105 = vmatprep.subr.bf16.mxu0 %v1042
    %1106 = vmatpush1.bf16.msra.mxu0 %v1041
    %1107 = vmatprep.subr.bf16.mxu0 %v1044
    %1108 = vmatpush1.bf16.msra.mxu0 %v1043
    %1109 = vmatprep.subr.bf16.mxu0 %v1046
    %1110 = vmatpush1.bf16.msra.mxu0 %v1045
    %1111 = vmatprep.subr.bf16.mxu0 %v1048
    %1112 = vmatpush1.bf16.msra.mxu0 %v1047
    %1113 = vmatprep.subr.bf16.mxu0 %v1050
    %1114 = vmatpush1.bf16.msra.mxu0 %v1049
    %1115 = vmatprep.subr.bf16.mxu0 %v1052
    %1116 = vmatpush1.bf16.msra.mxu0 %v1051
    %1117 = vmatprep.subr.bf16.mxu0 %v1054
    %1118 = vmatpush1.bf16.msra.mxu0 %v1053
    %1119 = vmatprep.subr.bf16.mxu0 %v1056
    %1120 = vmatpush1.bf16.msra.mxu0 %v1055
    %1121 = vmatprep.mubr.bf16.mxu0 %v870
    %1122 = vmatmul.mubr.bf16.gmra.mrb[0].mxu0 %v869
    %v1123 = vpop.f32.mrb[0].mxu0
    %v1124 = vadd.f32 %v922, %v1123
    %v1125 = vpop.f32.mrb[0].mxu0
    %v1126 = vadd.f32 %v926, %v1125
    %v1127 = vpop.f32.mrb[0].mxu0
    %v1128 = vadd.f32 %v922, %v1127
    %v1129 = vpop.f32.mrb[0].mxu0
    %v1130 = vadd.f32 %v926, %v1129
    %1131 = vmatprep.mubr.bf16.mxu0 %v872
    %1132 = vmatmul.mubr.bf16.gmra.mrb[0].mxu0 %v871
    %v1133 = vpop.f32.mrb[0].mxu0
    %v1134 = vadd.f32 %v922, %v1133
    %v1135 = vpop.f32.mrb[0].mxu0
    %v1136 = vadd.f32 %v926, %v1135
    %v1137 = vpop.f32.mrb[0].mxu0
    %v1138 = vadd.f32 %v922, %v1137
    %v1139 = vpop.f32.mrb[0].mxu0
    %v1140 = vadd.f32 %v926, %v1139
    %1141 = vmatprep.mubr.bf16.mxu0 %v874
    %1142 = vmatmul.mubr.bf16.gmra.mrb[0].mxu0 %v873
    %v1143 = vpop.f32.mrb[0].mxu0
    %v1144 = vadd.f32 %v922, %v1143
    %v1145 = vpop.f32.mrb[0].mxu0
    %v1146 = vadd.f32 %v926, %v1145
    %v1147 = vpop.f32.mrb[0].mxu0
    %v1148 = vadd.f32 %v922, %v1147
    %v1149 = vpop.f32.mrb[0].mxu0
    %v1150 = vadd.f32 %v926, %v1149
    %1151 = vmatprep.mubr.bf16.mxu0 %v876
    %1152 = vmatmul.mubr.bf16.gmra.mrb[0].mxu0 %v875
    %v1153 = vpop.f32.mrb[0].mxu0
    %v1154 = vadd.f32 %v922, %v1153
    %v1155 = vpop.f32.mrb[0].mxu0
    %v1156 = vadd.f32 %v926, %v1155
    %v1157 = vpop.f32.mrb[0].mxu0
    %v1158 = vadd.f32 %v922, %v1157
    %v1159 = vpop.f32.mrb[0].mxu0
    %v1160 = vadd.f32 %v926, %v1159
    %1161 = vmatprep.mubr.bf16.mxu0 %v878
    %1162 = vmatmul.mubr.bf16.gmra.mrb[0].mxu0 %v877
    %v1163 = vpop.f32.mrb[0].mxu0
    %v1164 = vadd.f32 %v922, %v1163
    %v1165 = vpop.f32.mrb[0].mxu0
    %v1166 = vadd.f32 %v926, %v1165
    %v1167 = vpop.f32.mrb[0].mxu0
    %v1168 = vadd.f32 %v922, %v1167
    %v1169 = vpop.f32.mrb[0].mxu0
    %v1170 = vadd.f32 %v926, %v1169
    %1171 = vmatprep.mubr.bf16.mxu0 %v880
    %1172 = vmatmul.mubr.bf16.gmra.mrb[0].mxu0 %v879
    %v1173 = vpop.f32.mrb[0].mxu0
    %v1174 = vadd.f32 %v922, %v1173
    %v1175 = vpop.f32.mrb[0].mxu0
    %v1176 = vadd.f32 %v926, %v1175
    %v1177 = vpop.f32.mrb[0].mxu0
    %v1178 = vadd.f32 %v922, %v1177
    %v1179 = vpop.f32.mrb[0].mxu0
    %v1180 = vadd.f32 %v926, %v1179
    %1181 = vmatprep.mubr.bf16.mxu0 %v882
    %1182 = vmatmul.mubr.bf16.gmra.mrb[0].mxu0 %v881
    %v1183 = vpop.f32.mrb[0].mxu0
    %v1184 = vadd.f32 %v922, %v1183
    %v1185 = vpop.f32.mrb[0].mxu0
    %v1186 = vadd.f32 %v926, %v1185
    %v1187 = vpop.f32.mrb[0].mxu0
    %v1188 = vadd.f32 %v922, %v1187
    %v1189 = vpop.f32.mrb[0].mxu0
    %v1190 = vadd.f32 %v926, %v1189
    %1191 = vmatprep.mubr.bf16.mxu0 %v884
    %1192 = vmatmul.mubr.bf16.gmra.mrb[0].mxu0 %v883
    %v1193 = vpop.f32.mrb[0].mxu0
    %v1194 = vadd.f32 %v922, %v1193
    %v1195 = vpop.f32.mrb[0].mxu0
    %v1196 = vadd.f32 %v926, %v1195
    %v1197 = vpop.f32.mrb[0].mxu0
    %v1198 = vadd.f32 %v922, %v1197
    %v1199 = vpop.f32.mrb[0].mxu0
    %v1200 = vadd.f32 %v926, %v1199
    %1201 = vdwg.mxu0
    %v1202 = vmax.f32 %v1124, 0.0
    %v1203 = vmax.f32 %v1126, 0.0
    %v1204 = vmax.f32 %v1128, 0.0
    %v1205 = vmax.f32 %v1130, 0.0
    %v1206 = vmax.f32 %v1134, 0.0
    %v1207 = vmax.f32 %v1136, 0.0
    %v1208 = vmax.f32 %v1138, 0.0
    %v1209 = vmax.f32 %v1140, 0.0
    %v1210 = vmax.f32 %v1144, 0.0
    %v1211 = vmax.f32 %v1146, 0.0
    %v1212 = vmax.f32 %v1148, 0.0
    %v1213 = vmax.f32 %v1150, 0.0
    %v1214 = vmax.f32 %v1154, 0.0
    %v1215 = vmax.f32 %v1156, 0.0
    %v1216 = vmax.f32 %v1158, 0.0
    %v1217 = vmax.f32 %v1160, 0.0
    %v1218 = vmax.f32 %v1164, 0.0
    %v1219 = vmax.f32 %v1166, 0.0
    %v1220 = vmax.f32 %v1168, 0.0
    %v1221 = vmax.f32 %v1170, 0.0
    %v1222 = vmax.f32 %v1174, 0.0
    %v1223 = vmax.f32 %v1176, 0.0
    %v1224 = vmax.f32 %v1178, 0.0
    %v1225 = vmax.f32 %v1180, 0.0
    %v1226 = vmax.f32 %v1184, 0.0
    %v1227 = vmax.f32 %v1186, 0.0
    %v1228 = vmax.f32 %v1188, 0.0
    %v1229 = vmax.f32 %v1190, 0.0
    %v1230 = vmax.f32 %v1194, 0.0
    %v1231 = vmax.f32 %v1196, 0.0
    %v1232 = vmax.f32 %v1198, 0.0
    %v1233 = vmax.f32 %v1200, 0.0
    %v1234 = vpack.c.bf16 %v1204, %v1202
    %v1235 = vpack.c.bf16 %v1205, %v1203
    %v1236 = vpack.c.bf16 %v1208, %v1206
    %v1237 = vpack.c.bf16 %v1209, %v1207
    %v1238 = vpack.c.bf16 %v1212, %v1210
    %v1239 = vpack.c.bf16 %v1213, %v1211
    %v1240 = vpack.c.bf16 %v1216, %v1214
    %v1241 = vpack.c.bf16 %v1217, %v1215
    %v1242 = vpack.c.bf16 %v1220, %v1218
    %v1243 = vpack.c.bf16 %v1221, %v1219
    %v1244 = vpack.c.bf16 %v1224, %v1222
    %v1245 = vpack.c.bf16 %v1225, %v1223
    %v1246 = vpack.c.bf16 %v1228, %v1226
    %v1247 = vpack.c.bf16 %v1229, %v1227
    %v1248 = vpack.c.bf16 %v1232, %v1230
    %v1249 = vpack.c.bf16 %v1233, %v1231
    %v1250 = vld [vmem:[#allocation4] sm:$0xf]
    %v1251 = vld [vmem:[#allocation4 + $0x4] sm:$0xf]
    %v1252 = vld [vmem:[#allocation4 + $0x8] sm:$0xf]
    %v1253 = vld [vmem:[#allocation4 + $0xc] sm:$0xf]
    %v1254 = vld [vmem:[#allocation4 + $0x10] sm:$0xf]
    %v1255 = vld [vmem:[#allocation4 + $0x14] sm:$0xf]
    %v1256 = vld [vmem:[#allocation4 + $0x18] sm:$0xf]
    %v1257 = vld [vmem:[#allocation4 + $0x1c] sm:$0xf]
    %v1258 = vld [vmem:[#allocation4 + $0x20] sm:$0xf]
    %v1259 = vld [vmem:[#allocation4 + $0x24] sm:$0xf]
    %v1260 = vld [vmem:[#allocation4 + $0x28] sm:$0xf]
    %v1261 = vld [vmem:[#allocation4 + $0x2c] sm:$0xf]
    %v1262 = vld [vmem:[#allocation4 + $0x30] sm:$0xf]
    %v1263 = vld [vmem:[#allocation4 + $0x34] sm:$0xf]
    %v1264 = vld [vmem:[#allocation4 + $0x38] sm:$0xf]
    %v1265 = vld [vmem:[#allocation4 + $0x3c] sm:$0xf]
    %v1266 = vld [vmem:[#allocation4 + $0x40] sm:$0xf]
    %v1267 = vld [vmem:[#allocation4 + $0x44] sm:$0xf]
    %v1268 = vld [vmem:[#allocation4 + $0x48] sm:$0xf]
    %v1269 = vld [vmem:[#allocation4 + $0x4c] sm:$0xf]
    %v1270 = vld [vmem:[#allocation4 + $0x50] sm:$0xf]
    %v1271 = vld [vmem:[#allocation4 + $0x54] sm:$0xf]
    %v1272 = vld [vmem:[#allocation4 + $0x58] sm:$0xf]
    %v1273 = vld [vmem:[#allocation4 + $0x5c] sm:$0xf]
    %v1274 = vld [vmem:[#allocation4 + $0x60] sm:$0xf]
    %v1275 = vld [vmem:[#allocation4 + $0x64] sm:$0xf]
    %v1276 = vld [vmem:[#allocation4 + $0x68] sm:$0xf]
    %v1277 = vld [vmem:[#allocation4 + $0x6c] sm:$0xf]
    %v1278 = vld [vmem:[#allocation4 + $0x70] sm:$0xf]
    %v1279 = vld [vmem:[#allocation4 + $0x74] sm:$0xf]
    %v1280 = vld [vmem:[#allocation4 + $0x78] sm:$0xf]
    %v1281 = vld [vmem:[#allocation4 + $0x7c] sm:$0xf]
    %v1282 = vld [vmem:[%s10] sm:$0x1]
    %v1284 = vlaneseq
    %v1285 = vshrl.u32 %v1284, 7
    %v1286 = vsub.s32 0, %v1285
    %v1287 = vrot.slane %v1282, %v1286
    %v1321 = vunpack.c.l.b16 %v1250
    %v1322 = vunpack.c.l.b16 %v1251
    %v1323 = vunpack.c.l.b16 %v1252
    %v1324 = vunpack.c.l.b16 %v1253
    %v1325 = vunpack.c.l.b16 %v1254
    %v1326 = vunpack.c.l.b16 %v1255
    %v1327 = vunpack.c.l.b16 %v1256
    %v1328 = vunpack.c.l.b16 %v1257
    %v1329 = vunpack.c.l.b16 %v1258
    %v1330 = vunpack.c.l.b16 %v1259
    %v1331 = vunpack.c.l.b16 %v1260
    %v1332 = vunpack.c.l.b16 %v1261
    %v1333 = vunpack.c.l.b16 %v1262
    %v1334 = vunpack.c.l.b16 %v1263
    %v1335 = vunpack.c.l.b16 %v1264
    %v1336 = vunpack.c.l.b16 %v1265
    %v1337 = vunpack.c.l.b16 %v1266
    %v1338 = vunpack.c.l.b16 %v1267
    %v1339 = vunpack.c.l.b16 %v1268
    %v1340 = vunpack.c.l.b16 %v1269
    %v1341 = vunpack.c.l.b16 %v1270
    %v1342 = vunpack.c.l.b16 %v1271
    %v1343 = vunpack.c.l.b16 %v1272
    %v1344 = vunpack.c.l.b16 %v1273
    %v1345 = vunpack.c.l.b16 %v1274
    %v1346 = vunpack.c.l.b16 %v1275
    %v1347 = vunpack.c.l.b16 %v1276
    %v1348 = vunpack.c.l.b16 %v1277
    %v1349 = vunpack.c.l.b16 %v1278
    %v1350 = vunpack.c.l.b16 %v1279
    %v1351 = vunpack.c.l.b16 %v1280
    %v1352 = vunpack.c.l.b16 %v1281
    %v1353 = vpack.c.b16 %v1322, %v1321
    %v1354 = vpack.c.b16 %v1324, %v1323
    %v1355 = vpack.c.b16 %v1326, %v1325
    %v1356 = vpack.c.b16 %v1328, %v1327
    %v1357 = vpack.c.b16 %v1330, %v1329
    %v1358 = vpack.c.b16 %v1332, %v1331
    %v1359 = vpack.c.b16 %v1334, %v1333
    %v1360 = vpack.c.b16 %v1336, %v1335
    %v1361 = vpack.c.b16 %v1338, %v1337
    %v1362 = vpack.c.b16 %v1340, %v1339
    %v1363 = vpack.c.b16 %v1342, %v1341
    %v1364 = vpack.c.b16 %v1344, %v1343
    %v1365 = vpack.c.b16 %v1346, %v1345
    %v1366 = vpack.c.b16 %v1348, %v1347
    %v1367 = vpack.c.b16 %v1350, %v1349
    %v1368 = vpack.c.b16 %v1352, %v1351
    %1385 = vmatprep.subr.bf16.mxu0 0
    %1386 = vmatpush1.bf16.msra.mxu0 %v1353
    %1387 = vmatprep.subr.bf16.mxu0 0
    %1388 = vmatpush1.bf16.msra.mxu0 %v1354
    %1389 = vmatprep.subr.bf16.mxu0 0
    %1390 = vmatpush1.bf16.msra.mxu0 %v1355
    %1391 = vmatprep.subr.bf16.mxu0 0
    %1392 = vmatpush1.bf16.msra.mxu0 %v1356
    %1393 = vmatprep.subr.bf16.mxu0 0
    %1394 = vmatpush1.bf16.msra.mxu0 %v1357
    %1395 = vmatprep.subr.bf16.mxu0 0
    %1396 = vmatpush1.bf16.msra.mxu0 %v1358
    %1397 = vmatprep.subr.bf16.mxu0 0
    %1398 = vmatpush1.bf16.msra.mxu0 %v1359
    %1399 = vmatprep.subr.bf16.mxu0 0
    %1400 = vmatpush1.bf16.msra.mxu0 %v1360
    %1401 = vmatprep.subr.bf16.mxu0 0
    %1402 = vmatpush1.bf16.msra.mxu0 %v1361
    %1403 = vmatprep.subr.bf16.mxu0 0
    %1404 = vmatpush1.bf16.msra.mxu0 %v1362
    %1405 = vmatprep.subr.bf16.mxu0 0
    %1406 = vmatpush1.bf16.msra.mxu0 %v1363
    %1407 = vmatprep.subr.bf16.mxu0 0
    %1408 = vmatpush1.bf16.msra.mxu0 %v1364
    %1409 = vmatprep.subr.bf16.mxu0 0
    %1410 = vmatpush1.bf16.msra.mxu0 %v1365
    %1411 = vmatprep.subr.bf16.mxu0 0
    %1412 = vmatpush1.bf16.msra.mxu0 %v1366
    %1413 = vmatprep.subr.bf16.mxu0 0
    %1414 = vmatpush1.bf16.msra.mxu0 %v1367
    %1415 = vmatprep.subr.bf16.mxu0 0
    %1416 = vmatpush1.bf16.msra.mxu0 %v1368
    %1417 = vmatprep.mubr.bf16.mxu0 %v1235
    %1418 = vmatmul.mubr.bf16.gmra.mrb[0].mxu0 %v1234
    %v1419 = vpop.f32.mrb[0].mxu0
    %v1420 = vadd.f32 %v1287, %v1419
    %v1421 = vpop.f32.mrb[0].mxu0
    %v1422 = vpop.f32.mrb[0].mxu0
    %v1423 = vadd.f32 %v1287, %v1422
    %v1424 = vpop.f32.mrb[0].mxu0
    %1425 = vmatprep.mubr.bf16.mxu0 %v1237
    %1426 = vmatmul.mubr.bf16.gmra.mrb[0].mxu0 %v1236
    %v1427 = vpop.f32.mrb[0].mxu0
    %v1428 = vadd.f32 %v1287, %v1427
    %v1429 = vpop.f32.mrb[0].mxu0
    %v1430 = vpop.f32.mrb[0].mxu0
    %v1431 = vadd.f32 %v1287, %v1430
    %v1432 = vpop.f32.mrb[0].mxu0
    %1433 = vmatprep.mubr.bf16.mxu0 %v1239
    %1434 = vmatmul.mubr.bf16.gmra.mrb[0].mxu0 %v1238
    %v1435 = vpop.f32.mrb[0].mxu0
    %v1436 = vadd.f32 %v1287, %v1435
    %v1437 = vpop.f32.mrb[0].mxu0
    %v1438 = vpop.f32.mrb[0].mxu0
    %v1439 = vadd.f32 %v1287, %v1438
    %v1440 = vpop.f32.mrb[0].mxu0
    %1441 = vmatprep.mubr.bf16.mxu0 %v1241
    %1442 = vmatmul.mubr.bf16.gmra.mrb[0].mxu0 %v1240
    %v1443 = vpop.f32.mrb[0].mxu0
    %v1444 = vadd.f32 %v1287, %v1443
    %v1445 = vpop.f32.mrb[0].mxu0
    %v1446 = vpop.f32.mrb[0].mxu0
    %v1447 = vadd.f32 %v1287, %v1446
    %v1448 = vpop.f32.mrb[0].mxu0
    %1449 = vmatprep.mubr.bf16.mxu0 %v1243
    %1450 = vmatmul.mubr.bf16.gmra.mrb[0].mxu0 %v1242
    %v1451 = vpop.f32.mrb[0].mxu0
    %v1452 = vadd.f32 %v1287, %v1451
    %v1453 = vpop.f32.mrb[0].mxu0
    %v1454 = vpop.f32.mrb[0].mxu0
    %v1455 = vadd.f32 %v1287, %v1454
    %v1456 = vpop.f32.mrb[0].mxu0
    %1457 = vmatprep.mubr.bf16.mxu0 %v1245
    %1458 = vmatmul.mubr.bf16.gmra.mrb[0].mxu0 %v1244
    %v1459 = vpop.f32.mrb[0].mxu0
    %v1460 = vadd.f32 %v1287, %v1459
    %v1461 = vpop.f32.mrb[0].mxu0
    %v1462 = vpop.f32.mrb[0].mxu0
    %v1463 = vadd.f32 %v1287, %v1462
    %v1464 = vpop.f32.mrb[0].mxu0
    %1465 = vmatprep.mubr.bf16.mxu0 %v1247
    %1466 = vmatmul.mubr.bf16.gmra.mrb[0].mxu0 %v1246
    %v1467 = vpop.f32.mrb[0].mxu0
    %v1468 = vadd.f32 %v1287, %v1467
    %v1469 = vpop.f32.mrb[0].mxu0
    %v1470 = vpop.f32.mrb[0].mxu0
    %v1471 = vadd.f32 %v1287, %v1470
    %v1472 = vpop.f32.mrb[0].mxu0
    %1473 = vmatprep.mubr.bf16.mxu0 %v1249
    %1474 = vmatmul.mubr.bf16.gmra.mrb[0].mxu0 %v1248
    %v1475 = vpop.f32.mrb[0].mxu0
    %v1476 = vadd.f32 %v1287, %v1475
    %v1477 = vpop.f32.mrb[0].mxu0
    %v1478 = vpop.f32.mrb[0].mxu0
    %v1479 = vadd.f32 %v1287, %v1478
    %v1480 = vpop.f32.mrb[0].mxu0
    %1481 = vdwg.mxu0
    %1482 = vxpose.xlu0.b32.start [1/16] %v1420, 128
    %1483 = vxpose.xlu0.b32.cont [2/16] %v1423, 128
    %1484 = vxpose.xlu0.b32.cont [3/16] %v1428, 128
    %1485 = vxpose.xlu0.b32.cont [4/16] %v1431, 128
    %1486 = vxpose.xlu0.b32.cont [5/16] %v1436, 128
    %1487 = vxpose.xlu0.b32.cont [6/16] %v1439, 128
    %1488 = vxpose.xlu0.b32.cont [7/16] %v1444, 128
    %1489 = vxpose.xlu0.b32.cont [8/16] %v1447, 128
    %1490 = vxpose.xlu0.b32.cont [9/16] %v1452, 128
    %1491 = vxpose.xlu0.b32.cont [10/16] %v1455, 128
    %1492 = vxpose.xlu0.b32.cont [11/16] %v1460, 128
    %1493 = vxpose.xlu0.b32.cont [12/16] %v1463, 128
    %1494 = vxpose.xlu0.b32.cont [13/16] %v1468, 128
    %1495 = vxpose.xlu0.b32.cont [14/16] %v1471, 128
    %1496 = vxpose.xlu0.b32.cont [15/16] %v1476, 128
    %1497 = vxpose.xlu0.b32.end [16/16] %v1479, 128
    %v1498 = vpop.trf.xlu0
    %v1499 = vpop.trf.xlu0
    %v1500 = vpop.trf.xlu0
    %v1501 = vpop.trf.xlu0
    %v1502 = vpop.trf.xlu0
    %v1503 = vpop.trf.xlu0
    %v1504 = vpop.trf.xlu0
    %v1505 = vpop.trf.xlu0
    %v1506 = vpop.trf.xlu0
    %v1507 = vpop.trf.xlu0
    %v1508 = vpop.trf.xlu0
    %v1509 = vpop.trf.xlu0
    %v1510 = vpop.trf.xlu0
    %v1511 = vpop.trf.xlu0
    %v1512 = vpop.trf.xlu0
    %v1513 = vpop.trf.xlu0
    %1514 = vst [vmem:[%s11] sm:$0xff] %v1498
    // Predicated region
    $region54: #{soft_q_forward_multi.1} parent=1 // pred_check
      _
    $region55: #{soft_q_forward_multi.1} parent=1 // pred_check_branch
      %1516 = sbr.rel (0) target = $region57
    $region56: #{soft_q_forward_multi.1} parent=1 // pred_region
      _
    $region57: #{soft_q_forward_multi.1} parent=1 // pred_fallthru
      _
    // Predicated region
    $region58: #{soft_q_forward_multi.1} parent=1 // pred_check
      _
    $region59: #{soft_q_forward_multi.1} parent=1 // pred_check_branch
      %1518 = sbr.rel (0) target = $region61
    $region60: #{soft_q_forward_multi.1} parent=1 // pred_region
      _
    $region61: #{soft_q_forward_multi.1} parent=1 // pred_fallthru
      _
    %1519 = vsyncpa [#allocation3], 1
    %1520 = vsyncpa [#allocation5], 1

</llo_original>
